<compile_context>
chip_gen: v7x
topology: tpu7x:2x2x1
jax: 0.10.0
libtpu: 0.0.40
codegen_flags: <defaults>
</compile_context>

<pallas_src>
import functools

import jax
import jax.numpy as jnp
from jax import lax
from jax.experimental import pallas as pl
from jax.experimental.pallas import tpu as pltpu


# ---------------------------------------------------------------------------
# elementwise helpers (kernel-side)
# ---------------------------------------------------------------------------

def _softplus(x):
    # Numerically stable softplus: max(x, 0) + log1p(exp(-|x|)).
    return jnp.maximum(x, 0.0) + jnp.log1p(jnp.exp(-jnp.abs(x)))


def _mish(x):
    # mish(x) = x * tanh(softplus(x)).
    # With t = exp(min(x, 20)) and s = t*(t+2): tanh(softplus(x)) = s/(s+2).
    # -> one EUP exp + one EUP approx reciprocal (plus a VPU Newton step)
    # instead of exp + log1p + tanh. Clamp at 20: for x > 20, mish(x) == x in f32.
    t = jnp.exp(jnp.minimum(x, 20.0))
    s = t * (t + 2.0)
    d = s + 2.0                       # d >= 2, well conditioned
    r = pl.reciprocal(d, approx=True)
    r = r * (2.0 - d * r)             # Newton refinement (VPU has slack)
    return x * (s * r)


# ---------------------------------------------------------------------------
# kernel
# ---------------------------------------------------------------------------

def eta_mlp_kernel(x_ref, w0_ref, b0_ref, w1_ref, b1_ref, w2_ref, b2_ref,
                   o_ref, *, eta_eps, row_chunk):
    """Fused: Linear -> Mish -> Linear -> Mish -> Linear -> softplus + eps.

    Shapes are the (possibly lane-packed) shapes: x [rows, Din], w0 [Din, H],
    w1 [H, H], w2 [H, Dout], biases [1, *]; all f32.
    """
    w0 = w0_ref[...]
    w1 = w1_ref[...]
    w2 = w2_ref[...]
    # Bias broadcasts hoisted out of the chunk loop (broadcast_in_dim is not
    # CSE'd across loop iterations).
    b0 = jnp.broadcast_to(b0_ref[...], (row_chunk, w0.shape[1]))
    b1 = jnp.broadcast_to(b1_ref[...], (row_chunk, w1.shape[1]))
    b2 = jnp.broadcast_to(b2_ref[...], (row_chunk, w2.shape[1]))

    block_rows = x_ref.shape[0]
    n_chunks = block_rows // row_chunk

    def do_chunk(r):
        x = x_ref[pl.ds(r, row_chunk), :]
        h = jnp.dot(x, w0, preferred_element_type=jnp.float32) + b0
        h = _mish(h)
        h = jnp.dot(h, w1, preferred_element_type=jnp.float32) + b1
        h = _mish(h)
        eta_free = jnp.dot(h, w2, preferred_element_type=jnp.float32) + b2
        o_ref[pl.ds(r, row_chunk), :] = (
            _softplus(eta_free) + eta_eps).astype(o_ref.dtype)

    if n_chunks == 1:
        do_chunk(0)
    else:
        # Row-chunk loop bounds vreg live ranges of the hidden activations
        # while the outer DMA tile (block_rows) stays big.
        def body(c, carry):
            do_chunk(pl.multiple_of(c * row_chunk, row_chunk))
            return carry

        lax.fori_loop(0, n_chunks, body, 0, unroll=(n_chunks <= 8))


# ---------------------------------------------------------------------------
# packing + tiling heuristics
# ---------------------------------------------------------------------------

def _lane_pad(n):
    return -(-n // 128) * 128


def _block_diag(w, p):
    """[fin, fout] -> [p*fin, p*fout] block-diagonal with p copies of w."""
    if p == 1:
        return w
    fin, fout = w.shape
    eye = jnp.eye(p, dtype=w.dtype)
    return (eye[:, None, :, None] * w[None, :, None, :]).reshape(p * fin, p * fout)


def _blockdiag_weight_bytes(p, in_dim, hidden_dim, out_dim):
    din, h, dout = p * in_dim, p * hidden_dim, p * out_dim
    return 4 * (din * h + h * h + h * dout + 2 * h + dout)


def _choose_pack(in_dim, hidden_dim, out_dim, max_weight_bytes=4 << 20):
    """How many batch rows to pack into the lane axis via block-diag weights.

    Target: lane-dense hidden (P*hidden >= 128) and lane-dense output
    (P*out >= 128, unmasked stores), bounded by the block-diag weight blow-up.
    """
    if hidden_dim >= 128:
        return 1   # already lane-dense; packing would only blow up the weights
    p = 1
    while (p * hidden_dim < 128 or p * out_dim < 128) and p < 128:
        nxt = 2 * p
        if _blockdiag_weight_bytes(nxt, in_dim, hidden_dim, out_dim) > max_weight_bytes:
            break
        p = nxt
    return p


def _choose_block_rows(bp, bytes_per_row, budget_bytes):
    """Packed rows per grid step: largest divisor of bp within the VMEM budget,
    preferring an even (>=2) step count so v7x's 2 TensorCores split evenly."""
    if bp <= 8:
        return bp
    cap = max(8, min(4096, (budget_bytes // bytes_per_row) // 8 * 8))
    best = None
    for br in range(8, min(cap, bp // 2) + 1, 8):
        if bp % br:
            continue
        key = ((bp // br) % 2 == 0, br)   # (even step count, tile size)
        if best is None or key > best:
            best = key
    return best[1] if best is not None else bp


def _choose_row_chunk(block_rows, widest_lanes):
    # Keep the widest f32 intermediate within ~32 vregs (128 KiB) so hidden
    # activations stay vreg-resident (v5e has a single vector-store slot).
    rc = min(128, block_rows, max(8, (128 * 1024) // (widest_lanes * 4)))
    rc = max(8, (rc // 8) * 8)
    while rc > 8 and block_rows % rc:
        rc -= 8
    return rc if block_rows % rc == 0 else block_rows


# ---------------------------------------------------------------------------
# wrapper
# ---------------------------------------------------------------------------

def eta_mlp_forward(x, params, *, eta_eps=1e-8, pack=None, block_rows=None,
                    vmem_limit_bytes=16 * 1024 * 1024):
    """x: [B, in_dim] float32. params: dict with w0,b0,w1,b1,w2,b2
    (weights stored [in, out], biases [1, out])."""
    B, in_dim = x.shape
    w0, b0 = params["w0"], params["b0"]
    w1, b1 = params["w1"], params["b1"]
    w2, b2 = params["w2"], params["b2"]
    hidden_dim = w0.shape[1]
    out_dim = w2.shape[1]

    p = _choose_pack(in_dim, hidden_dim, out_dim) if pack is None else pack
    assert p >= 1

    # Pad the batch to a multiple of 8*p (8-sublane tiles after packing). The
    # padded rows are zeros and get sliced off the output; block-diag weights
    # keep every original row independent, so real rows are unaffected.
    pad_to = 8 * p
    b_pad = -(-B // pad_to) * pad_to
    x_p = jnp.pad(x, ((0, b_pad - B), (0, 0))) if b_pad != B else x

    bp = b_pad // p                      # packed rows
    din, h, dout = p * in_dim, p * hidden_dim, p * out_dim
    x_p = x_p.reshape(bp, din)           # rows are contiguous -> free reshape

    w0_p, w1_p, w2_p = (_block_diag(w, p) for w in (w0, w1, w2))
    b0_p, b1_p, b2_p = (jnp.tile(b, (1, p)) for b in (b0, b1, b2))

    # VMEM accounting: double-buffered x/out tiles + f32 hidden intermediates,
    # plus the (grid-invariant, double-buffered) weights; leave 2 MiB margin.
    weight_bytes = 2 * _blockdiag_weight_bytes(p, in_dim, hidden_dim, out_dim)
    bytes_per_row = 4 * 2 * (_lane_pad(din) + _lane_pad(h) + _lane_pad(dout))
    if block_rows is None:
        budget = max(bytes_per_row * 8,
                     vmem_limit_bytes - weight_bytes - (2 << 20))
        block_rows = _choose_block_rows(bp, bytes_per_row, budget)
    assert bp % block_rows == 0 and (block_rows % 8 == 0 or block_rows == bp)
    grid = (bp // block_rows,)
    row_chunk = _choose_row_chunk(block_rows, _lane_pad(h))

    cost = pl.CostEstimate(
        flops=2 * bp * (din * h + h * h + h * dout),
        # 2 EUP ops per mish element x 2 layers + 2 per softplus element.
        transcendentals=bp * (4 * h + 2 * dout),
        bytes_accessed=(bp * (din + dout) * 4
                        + (din * h + h * h + h * dout + 2 * h + dout) * 4),
    )

    kernel = functools.partial(eta_mlp_kernel, eta_eps=eta_eps,
                               row_chunk=row_chunk)

    out_p = pl.pallas_call(
        kernel,
        out_shape=jax.ShapeDtypeStruct((bp, dout), jnp.float32),
        grid_spec=pltpu.PrefetchScalarGridSpec(
            num_scalar_prefetch=0,
            grid=grid,
            in_specs=[
                pl.BlockSpec((block_rows, din), lambda i: (i, 0)),
                pl.BlockSpec((din, h), lambda i: (0, 0)),
                pl.BlockSpec((1, h), lambda i: (0, 0)),
                pl.BlockSpec((h, h), lambda i: (0, 0)),
                pl.BlockSpec((1, h), lambda i: (0, 0)),
                pl.BlockSpec((h, dout), lambda i: (0, 0)),
                pl.BlockSpec((1, dout), lambda i: (0, 0)),
            ],
            out_specs=pl.BlockSpec((block_rows, dout), lambda i: (i, 0)),
        ),
        compiler_params=pltpu.CompilerParams(
            dimension_semantics=("parallel",),
            vmem_limit_bytes=vmem_limit_bytes),
        cost_estimate=cost,
    )(x_p, w0_p, b0_p, w1_p, b1_p, w2_p, b2_p)

    out = out_p.reshape(b_pad, out_dim)
    return out[:B] if b_pad != B else out


# ---------------------------------------------------------------------------
# init + pure-JAX reference
# ---------------------------------------------------------------------------

def init_eta_mlp_params(key, in_dim, out_dim, hidden_dim):
    """PyTorch-default U(-1/sqrt(fan_in), +) init; last layer zero-initialized
    as in EtaMLP.__init__."""
    k0, k1, k2, k3 = jax.random.split(key, 4)

    def linear_init(kw, kb, fan_in, fan_out):
        bound = 1.0 / jnp.sqrt(fan_in)
        w = jax.random.uniform(kw, (fan_in, fan_out), jnp.float32, -bound, bound)
        b = jax.random.uniform(kb, (1, fan_out), jnp.float32, -bound, bound)
        return w, b

    w0, b0 = linear_init(k0, k1, in_dim, hidden_dim)
    w1, b1 = linear_init(k2, k3, hidden_dim, hidden_dim)
    w2 = jnp.zeros((hidden_dim, out_dim), jnp.float32)
    b2 = jnp.zeros((1, out_dim), jnp.float32)
    return dict(w0=w0, b0=b0, w1=w1, b1=b1, w2=w2, b2=b2)


def eta_mlp_reference(x, params, eta_eps=1e-8):
    def mish(v):
        return v * jnp.tanh(jax.nn.softplus(v))

    h = mish(x @ params["w0"] + params["b0"])
    h = mish(h @ params["w1"] + params["b1"])
    eta_free = h @ params["w2"] + params["b2"]
    return jax.nn.softplus(eta_free) + eta_eps


# ---------------------------------------------------------------------------
# self-test
# ---------------------------------------------------------------------------

if __name__ == "__main__":
    key = jax.random.PRNGKey(0)
    k_params, k_x, k_w2, k_b2 = jax.random.split(key, 4)

    B, in_dim, out_dim, hidden_dim = 512, 16, 8, 32  # n_hidden=2 -> 3 linears
    params = init_eta_mlp_params(k_params, in_dim, out_dim, hidden_dim)
    x = jax.random.normal(k_x, (B, in_dim), jnp.float32)

    # 1) module-faithful params (zero-init last layer); lane-packed path.
    out = jax.block_until_ready(eta_mlp_forward(x, params))
    ref = eta_mlp_reference(x, params)
    assert out.shape == (B, out_dim)
    assert jnp.allclose(out, ref, atol=1e-4, rtol=1e-4), "mismatch (zero last)"

    # 2) randomized last layer to exercise the full nonlinear path.
    bound = 1.0 / jnp.sqrt(hidden_dim)
    params_rnd = dict(params)
    params_rnd["w2"] = jax.random.uniform(
        k_w2, (hidden_dim, out_dim), jnp.float32, -bound, bound)
    params_rnd["b2"] = jax.random.uniform(
        k_b2, (1, out_dim), jnp.float32, -bound, bound)
    out2 = jax.block_until_ready(eta_mlp_forward(x, params_rnd))
    ref2 = eta_mlp_reference(x, params_rnd)
    assert jnp.allclose(out2, ref2, atol=2e-3, rtol=2e-3), "mismatch (rand)"

    # 3) batch not a multiple of 8*P -> wrapper pads, output sliced back.
    x_small = jax.random.normal(k_x, (10, in_dim), jnp.float32)
    out3 = jax.block_until_ready(eta_mlp_forward(x_small, params_rnd))
    ref3 = eta_mlp_reference(x_small, params_rnd)
    assert out3.shape == (10, out_dim)
    assert jnp.allclose(out3, ref3, atol=2e-3, rtol=2e-3), "mismatch (pad B)"

    # 4) unpacked path (pack=1) as a cross-check of the packing transform.
    out4 = jax.block_until_ready(eta_mlp_forward(x, params_rnd, pack=1))
    assert jnp.allclose(out4, ref2, atol=2e-3, rtol=2e-3), "mismatch (pack=1)"

    print("KERNEL_OK")
</pallas_src>

<mosaic_0001>
module attributes {stable_mosaic.version = 11 : i64} {
  func.func @eta_mlp_kernel(%arg0: i32, %arg1: memref<16x256xf32, #tpu.memory_space<vmem>>, %arg2: memref<256x512xf32, #tpu.memory_space<vmem>>, %arg3: memref<1x512xf32, #tpu.memory_space<vmem>>, %arg4: memref<512x512xf32, #tpu.memory_space<vmem>>, %arg5: memref<1x512xf32, #tpu.memory_space<vmem>>, %arg6: memref<512x128xf32, #tpu.memory_space<vmem>>, %arg7: memref<1x128xf32, #tpu.memory_space<vmem>>, %arg8: memref<16x128xf32, #tpu.memory_space<vmem>>) attributes {dimension_semantics = [#tpu.dimension_semantics<parallel>], iteration_bounds = array<i64: 2>, scalar_prefetch = 0 : i64, scratch_operands = 0 : i64, tpu.core_type = #tpu.core_type<tc>, window_params = [{transform_indices = @transform_0, window_bounds = array<i64: 16, 256>}, {pipeline_mode = #tpu.pipeline_mode<synchronous>, transform_indices = @transform_1, window_bounds = array<i64: 256, 512>}, {pipeline_mode = #tpu.pipeline_mode<synchronous>, transform_indices = @transform_2, window_bounds = array<i64: 1, 512>}, {pipeline_mode = #tpu.pipeline_mode<synchronous>, transform_indices = @transform_3, window_bounds = array<i64: 512, 512>}, {pipeline_mode = #tpu.pipeline_mode<synchronous>, transform_indices = @transform_4, window_bounds = array<i64: 1, 512>}, {pipeline_mode = #tpu.pipeline_mode<synchronous>, transform_indices = @transform_5, window_bounds = array<i64: 512, 128>}, {pipeline_mode = #tpu.pipeline_mode<synchronous>, transform_indices = @transform_6, window_bounds = array<i64: 1, 128>}, {transform_indices = @transform_7, window_bounds = array<i64: 16, 128>}]} {
    %c0 = arith.constant 0 : index
    %c0_0 = arith.constant 0 : index
    %0 = vector.load %arg2[%c0, %c0_0] : memref<256x512xf32, #tpu.memory_space<vmem>>, vector<256x512xf32>
    %c0_1 = arith.constant 0 : index
    %c0_2 = arith.constant 0 : index
    %1 = vector.load %arg4[%c0_1, %c0_2] : memref<512x512xf32, #tpu.memory_space<vmem>>, vector<512x512xf32>
    %c0_3 = arith.constant 0 : index
    %c0_4 = arith.constant 0 : index
    %2 = vector.load %arg6[%c0_3, %c0_4] : memref<512x128xf32, #tpu.memory_space<vmem>>, vector<512x128xf32>
    %c0_5 = arith.constant 0 : index
    %c0_6 = arith.constant 0 : index
    %3 = vector.load %arg3[%c0_5, %c0_6] : memref<1x512xf32, #tpu.memory_space<vmem>>, vector<1x512xf32>
    %4 = vector.shape_cast %3 : vector<1x512xf32> to vector<1x512xf32>
    %5 = vector.broadcast %4 : vector<1x512xf32> to vector<16x512xf32>
    %c0_7 = arith.constant 0 : index
    %c0_8 = arith.constant 0 : index
    %6 = vector.load %arg5[%c0_7, %c0_8] : memref<1x512xf32, #tpu.memory_space<vmem>>, vector<1x512xf32>
    %7 = vector.shape_cast %6 : vector<1x512xf32> to vector<1x512xf32>
    %8 = vector.broadcast %7 : vector<1x512xf32> to vector<16x512xf32>
    %c0_9 = arith.constant 0 : index
    %c0_10 = arith.constant 0 : index
    %9 = vector.load %arg7[%c0_9, %c0_10] : memref<1x128xf32, #tpu.memory_space<vmem>>, vector<1x128xf32>
    %10 = vector.shape_cast %9 : vector<1x128xf32> to vector<1x128xf32>
    %11 = vector.broadcast %10 : vector<1x128xf32> to vector<16x128xf32>
    %c0_11 = arith.constant 0 : index
    %c0_12 = arith.constant 0 : index
    %12 = vector.load %arg1[%c0_11, %c0_12] : memref<16x256xf32, #tpu.memory_space<vmem>>, vector<16x256xf32>
    %cst = arith.constant dense<0.000000e+00> : vector<16x512xf32>
    %13 = tpu.matmul %12, %0, %cst {dimension_numbers = #tpu.dot_dimension_numbers<[1], [0], [0], [1], [0, 0, 1, 1], [], []>} : vector<16x256xf32>, vector<256x512xf32>, vector<16x512xf32> -> vector<16x512xf32>
    %14 = arith.addf %13, %5 : vector<16x512xf32>
    %cst_13 = arith.constant 2.000000e+01 : f32
    %15 = vector.broadcast %cst_13 : f32 to vector<16x512xf32>
    %16 = arith.minimumf %14, %15 : vector<16x512xf32>
    %17 = math.exp %16 : vector<16x512xf32>
    %cst_14 = arith.constant 2.000000e+00 : f32
    %18 = vector.broadcast %cst_14 : f32 to vector<16x512xf32>
    %19 = arith.addf %17, %18 : vector<16x512xf32>
    %20 = arith.mulf %17, %19 : vector<16x512xf32>
    %cst_15 = arith.constant 2.000000e+00 : f32
    %21 = vector.broadcast %cst_15 : f32 to vector<16x512xf32>
    %22 = arith.addf %20, %21 : vector<16x512xf32>
    %23 = tpu.reciprocal %22 {approx = true} : vector<16x512xf32> -> vector<16x512xf32>
    %24 = arith.mulf %22, %23 : vector<16x512xf32>
    %cst_16 = arith.constant 2.000000e+00 : f32
    %25 = vector.broadcast %cst_16 : f32 to vector<16x512xf32>
    %26 = arith.subf %25, %24 : vector<16x512xf32>
    %27 = arith.mulf %23, %26 : vector<16x512xf32>
    %28 = arith.mulf %20, %27 : vector<16x512xf32>
    %29 = arith.mulf %14, %28 : vector<16x512xf32>
    %cst_17 = arith.constant dense<0.000000e+00> : vector<16x512xf32>
    %30 = tpu.matmul %29, %1, %cst_17 {dimension_numbers = #tpu.dot_dimension_numbers<[1], [0], [0], [1], [0, 0, 1, 1], [], []>} : vector<16x512xf32>, vector<512x512xf32>, vector<16x512xf32> -> vector<16x512xf32>
    %31 = arith.addf %30, %8 : vector<16x512xf32>
    %cst_18 = arith.constant 2.000000e+01 : f32
    %32 = vector.broadcast %cst_18 : f32 to vector<16x512xf32>
    %33 = arith.minimumf %31, %32 : vector<16x512xf32>
    %34 = math.exp %33 : vector<16x512xf32>
    %cst_19 = arith.constant 2.000000e+00 : f32
    %35 = vector.broadcast %cst_19 : f32 to vector<16x512xf32>
    %36 = arith.addf %34, %35 : vector<16x512xf32>
    %37 = arith.mulf %34, %36 : vector<16x512xf32>
    %cst_20 = arith.constant 2.000000e+00 : f32
    %38 = vector.broadcast %cst_20 : f32 to vector<16x512xf32>
    %39 = arith.addf %37, %38 : vector<16x512xf32>
    %40 = tpu.reciprocal %39 {approx = true} : vector<16x512xf32> -> vector<16x512xf32>
    %41 = arith.mulf %39, %40 : vector<16x512xf32>
    %cst_21 = arith.constant 2.000000e+00 : f32
    %42 = vector.broadcast %cst_21 : f32 to vector<16x512xf32>
    %43 = arith.subf %42, %41 : vector<16x512xf32>
    %44 = arith.mulf %40, %43 : vector<16x512xf32>
    %45 = arith.mulf %37, %44 : vector<16x512xf32>
    %46 = arith.mulf %31, %45 : vector<16x512xf32>
    %cst_22 = arith.constant dense<0.000000e+00> : vector<16x128xf32>
    %47 = tpu.matmul %46, %2, %cst_22 {dimension_numbers = #tpu.dot_dimension_numbers<[1], [0], [0], [1], [0, 0, 1, 1], [], []>} : vector<16x512xf32>, vector<512x128xf32>, vector<16x128xf32> -> vector<16x128xf32>
    %48 = arith.addf %47, %11 : vector<16x128xf32>
    %cst_23 = arith.constant 0.000000e+00 : f32
    %49 = vector.broadcast %cst_23 : f32 to vector<16x128xf32>
    %50 = arith.maximumf %48, %49 : vector<16x128xf32>
    %51 = math.absf %48 : vector<16x128xf32>
    %cst_24 = arith.constant 0.000000e+00 : f32
    %52 = vector.broadcast %cst_24 : f32 to vector<16x128xf32>
    %53 = arith.subf %52, %51 : vector<16x128xf32>
    %54 = math.exp %53 : vector<16x128xf32>
    %55 = math.log1p %54 : vector<16x128xf32>
    %56 = arith.addf %50, %55 : vector<16x128xf32>
    %cst_25 = arith.constant 9.99999993E-9 : f32
    %57 = vector.broadcast %cst_25 : f32 to vector<16x128xf32>
    %58 = arith.addf %56, %57 : vector<16x128xf32>
    %c0_26 = arith.constant 0 : index
    %c0_27 = arith.constant 0 : index
    %59 = vector.load %arg8[%c0_26, %c0_27] : memref<16x128xf32, #tpu.memory_space<vmem>>, vector<16x128xf32>
    tpu.vector_store %arg8[%c0_26, %c0_27], %58 {strides = array<i32>} : memref<16x128xf32, #tpu.memory_space<vmem>>, vector<16x128xf32>,
    return
  }
  func.func @transform_0(%arg0: i32) -> (i32, i32) {
    %c0_i32 = arith.constant 0 : i32
    %c0_i32_0 = arith.constant 0 : i32
    return %arg0, %c0_i32 : i32, i32
  }
  func.func @transform_1(%arg0: i32) -> (i32, i32) {
    %c0_i32 = arith.constant 0 : i32
    %c0_i32_0 = arith.constant 0 : i32
    %c0_i32_1 = arith.constant 0 : i32
    return %c0_i32, %c0_i32_0 : i32, i32
  }
  func.func @transform_2(%arg0: i32) -> (i32, i32) {
    %c0_i32 = arith.constant 0 : i32
    %c0_i32_0 = arith.constant 0 : i32
    %c0_i32_1 = arith.constant 0 : i32
    return %c0_i32, %c0_i32_0 : i32, i32
  }
  func.func @transform_3(%arg0: i32) -> (i32, i32) {
    %c0_i32 = arith.constant 0 : i32
    %c0_i32_0 = arith.constant 0 : i32
    %c0_i32_1 = arith.constant 0 : i32
    return %c0_i32, %c0_i32_0 : i32, i32
  }
  func.func @transform_4(%arg0: i32) -> (i32, i32) {
    %c0_i32 = arith.constant 0 : i32
    %c0_i32_0 = arith.constant 0 : i32
    %c0_i32_1 = arith.constant 0 : i32
    return %c0_i32, %c0_i32_0 : i32, i32
  }
  func.func @transform_5(%arg0: i32) -> (i32, i32) {
    %c0_i32 = arith.constant 0 : i32
    %c0_i32_0 = arith.constant 0 : i32
    %c0_i32_1 = arith.constant 0 : i32
    return %c0_i32, %c0_i32_0 : i32, i32
  }
  func.func @transform_6(%arg0: i32) -> (i32, i32) {
    %c0_i32 = arith.constant 0 : i32
    %c0_i32_0 = arith.constant 0 : i32
    %c0_i32_1 = arith.constant 0 : i32
    return %c0_i32, %c0_i32_0 : i32, i32
  }
  func.func @transform_7(%arg0: i32) -> (i32, i32) {
    %c0_i32 = arith.constant 0 : i32
    %c0_i32_0 = arith.constant 0 : i32
    return %arg0, %c0_i32 : i32, i32
  }
}

</mosaic_0001>

<llo_original>
// kernel: tpu_custom_call.1
$region0: #{tpu_custom_call.1}
  #allocation0 [shape = 'u32[]', space=smem, size = 0x4, offset = 0x4, fixed_abs, tag = 'smem constant byte address 0x4 - core index']
  #allocation1 [shape = 'u32[144,128]{1,0:T(1,128)}', space=vmem, size = 0x12000, scoped, tag = 'internal scratch']
  %s0 = inlined_call_operand.hbm [shape: f32[32,256], index: 0, kind: input, shape index: {}]
  %s1 = inlined_call_operand.hbm [shape: f32[256,512], index: 1, kind: input, shape index: {}]
  %s2 = inlined_call_operand.vmem [shape: f32[1,512], index: 2, kind: input, shape index: {}]
  %s3 = inlined_call_operand.hbm [shape: f32[512,512], index: 3, kind: input, shape index: {}]
  %s4 = inlined_call_operand.vmem [shape: f32[1,512], index: 4, kind: input, shape index: {}]
  %s5 = inlined_call_operand.hbm [shape: f32[512,128], index: 5, kind: input, shape index: {}]
  %s6 = inlined_call_operand.vmem [shape: f32[1,128], index: 6, kind: input, shape index: {}]
  %s7 = inlined_call_operand.hbm [shape: f32[32,128], index: 7, kind: output, shape index: {}]
  %s8 = sld [smem:[#allocation0]]
  $region77: #{tpu_custom_call.1} parent=0
    _
  %s10 = ssub.s32 1, %s8
  %s11 = scalar_select 0, %s10, %s8
  $region1: #{tpu_custom_call.1} parent=0
    #allocation2 [shape = 'u8[32768]{0}', space=vmem, size = 0x8000, scoped, tag = 'input window, operand 0']
    #allocation3 [shape = 's32[2]{0}', space=sflag, size = 0x8, scoped, tag = 'scoped memory for tpu_custom_call.1']
    #allocation4 [shape = 's32[2]{0}', space=sflag, size = 0x8, scoped, tag = 'scoped memory for tpu_custom_call.1']
    #allocation5 [shape = 'u8[524288]{0}', space=vmem, size = 0x80000, scoped, tag = 'input window, operand 1, single buffered']
    #allocation6 [shape = 's32[1]{0}', space=sflag, size = 0x4, scoped, tag = 'scoped memory for tpu_custom_call.1']
    #allocation7 [shape = 'u8[1048576]{0}', space=vmem, size = 0x100000, scoped, tag = 'input window, operand 3, single buffered']
    #allocation8 [shape = 'u8[262144]{0}', space=vmem, size = 0x40000, scoped, tag = 'input window, operand 5, single buffered']
    #allocation9 [shape = 's32[1]{0}', space=sflag, size = 0x4, scoped, tag = 'scoped memory for tpu_custom_call.1']
    #allocation10 [shape = 'u8[16384]{0}', space=vmem, size = 0x4000, scoped, tag = 'output window, operand 0']
    %12 = vsyncpa [#allocation3], 0
    %s13 = scalar_lea.sflag [#allocation3], 1
    %14 = vsyncpa %s13, 0
    %15 = vsyncpa [#allocation6], 0
    %16 = vsyncpa [#allocation9], 0
    %17 = vsyncpa [#allocation4], 0
    %s18 = scalar_lea.sflag [#allocation4], 1
    %19 = vsyncpa %s18, 0
    loop: start=0, step=1, limit=4
    $region2: #{tpu_custom_call.1} parent=1 // loop_pre_header
      _
    $region3: #{tpu_custom_call.1} parent=1 // loop_header
      %s21 = sphi 0, %s25
      %p22 = scmp.ge.s32.totalorder %s21, 4
      %s31 = sphi 0, %s33
      %s34 = sphi 0, %s31
      %s35 = sphi 0, %s34
      %s51 = sphi 0, %s35
      %s55 = sphi 0, %s55
      %s57 = sphi 0, %s55
      %s58 = sphi 0, %s57
      %s72 = sphi 0, %s58
      %s76 = sphi 0, %s76
      %s78 = sphi 0, %s76
      %s79 = sphi 0, %s78
      %s93 = sphi 0, %s79
      %s97 = sphi 0, %s97
      %s99 = sphi 0, %s97
      %s100 = sphi 0, %s99
      %s114 = sphi 0, %s100
      %s118 = sphi 0, %s118
      %s120 = sphi 0, %s118
      %s121 = sphi 0, %s120
      %s135 = sphi 0, %s121
      %s139 = sphi 0, %s139
      %s141 = sphi 0, %s139
      %s142 = sphi 0, %s141
      %s156 = sphi 0, %s142
      %s160 = sphi 0, %s160
      %s162 = sphi 0, %s160
      %s163 = sphi 0, %s162
      %s177 = sphi 0, %s163
      %s183 = sphi 0, %s185
      %s186 = sphi 0, %s183
      %s187 = sphi 0, %s186
      %s203 = sphi 0, %s187
    $region4: #{tpu_custom_call.1} parent=1 // loop_header_branch
      %24 = sbr.rel (%p22) target = $region8
    $region5: #{tpu_custom_call.1} parent=1 // loop_body
      %s26 = ssub.s32 %s21, 1
      %s27 = ssub.s32 %s21, 2
      %s28 = sadd.s32 %s21, 1
      %s29 = ssub.s32 %s21, %s28
      %p30 = scmp.eq.s32.totalorder %s29, 0
      %s32 = sadd.s32 %s31, 1
      %s33 = scalar_select %p30, %s31, %s32
      %p36 = pneg %p30
      %p37 = scmp.eq.s32.totalorder %s21, 1
      %p38 = por %p36, %p37
      %p39 = scmp.ne.s32.totalorder %s31, %s34
      %p40 = scmp.eq.s32.totalorder %s21, 0
      %p41 = por %p39, %p40
      %p42 = scmp.ne.s32.totalorder %s31, %s34
      %p43 = scmp.eq.s32.totalorder %s26, 1
      %p44 = por %p42, %p43
      %p45 = scmp.ne.s32.totalorder %s34, %s35
      %p46 = scmp.eq.s32.totalorder %s26, 0
      %p47 = por %p45, %p46
      %p48 = scmp.ne.s32.totalorder %s34, %s35
      %p49 = scmp.eq.s32.totalorder %s27, 1
      %p50 = por %p48, %p49
      %p52 = scmp.ne.s32.totalorder %s35, %s51
      %p53 = scmp.eq.s32.totalorder %s27, 0
      %p54 = por %p52, %p53
      %s56 = sadd.s32 %s55, 1
      %p59 = scmp.eq.s32.totalorder %s21, 1
      %p60 = scmp.ne.s32.totalorder %s55, %s57
      %p61 = scmp.eq.s32.totalorder %s21, 0
      %p62 = por %p60, %p61
      %p63 = scmp.ne.s32.totalorder %s55, %s57
      %p64 = scmp.eq.s32.totalorder %s26, 1
      %p65 = por %p63, %p64
      %p66 = scmp.ne.s32.totalorder %s57, %s58
      %p67 = scmp.eq.s32.totalorder %s26, 0
      %p68 = por %p66, %p67
      %p69 = scmp.ne.s32.totalorder %s57, %s58
      %p70 = scmp.eq.s32.totalorder %s27, 1
      %p71 = por %p69, %p70
      %p73 = scmp.ne.s32.totalorder %s58, %s72
      %p74 = scmp.eq.s32.totalorder %s27, 0
      %p75 = por %p73, %p74
      %s77 = sadd.s32 %s76, 1
      %p80 = scmp.eq.s32.totalorder %s21, 1
      %p81 = scmp.ne.s32.totalorder %s76, %s78
      %p82 = scmp.eq.s32.totalorder %s21, 0
      %p83 = por %p81, %p82
      %p84 = scmp.ne.s32.totalorder %s76, %s78
      %p85 = scmp.eq.s32.totalorder %s26, 1
      %p86 = por %p84, %p85
      %p87 = scmp.ne.s32.totalorder %s78, %s79
      %p88 = scmp.eq.s32.totalorder %s26, 0
      %p89 = por %p87, %p88
      %p90 = scmp.ne.s32.totalorder %s78, %s79
      %p91 = scmp.eq.s32.totalorder %s27, 1
      %p92 = por %p90, %p91
      %p94 = scmp.ne.s32.totalorder %s79, %s93
      %p95 = scmp.eq.s32.totalorder %s27, 0
      %p96 = por %p94, %p95
      %s98 = sadd.s32 %s97, 1
      %p101 = scmp.eq.s32.totalorder %s21, 1
      %p102 = scmp.ne.s32.totalorder %s97, %s99
      %p103 = scmp.eq.s32.totalorder %s21, 0
      %p104 = por %p102, %p103
      %p105 = scmp.ne.s32.totalorder %s97, %s99
      %p106 = scmp.eq.s32.totalorder %s26, 1
      %p107 = por %p105, %p106
      %p108 = scmp.ne.s32.totalorder %s99, %s100
      %p109 = scmp.eq.s32.totalorder %s26, 0
      %p110 = por %p108, %p109
      %p111 = scmp.ne.s32.totalorder %s99, %s100
      %p112 = scmp.eq.s32.totalorder %s27, 1
      %p113 = por %p111, %p112
      %p115 = scmp.ne.s32.totalorder %s100, %s114
      %p116 = scmp.eq.s32.totalorder %s27, 0
      %p117 = por %p115, %p116
      %s119 = sadd.s32 %s118, 1
      %p122 = scmp.eq.s32.totalorder %s21, 1
      %p123 = scmp.ne.s32.totalorder %s118, %s120
      %p124 = scmp.eq.s32.totalorder %s21, 0
      %p125 = por %p123, %p124
      %p126 = scmp.ne.s32.totalorder %s118, %s120
      %p127 = scmp.eq.s32.totalorder %s26, 1
      %p128 = por %p126, %p127
      %p129 = scmp.ne.s32.totalorder %s120, %s121
      %p130 = scmp.eq.s32.totalorder %s26, 0
      %p131 = por %p129, %p130
      %p132 = scmp.ne.s32.totalorder %s120, %s121
      %p133 = scmp.eq.s32.totalorder %s27, 1
      %p134 = por %p132, %p133
      %p136 = scmp.ne.s32.totalorder %s121, %s135
      %p137 = scmp.eq.s32.totalorder %s27, 0
      %p138 = por %p136, %p137
      %s140 = sadd.s32 %s139, 1
      %p143 = scmp.eq.s32.totalorder %s21, 1
      %p144 = scmp.ne.s32.totalorder %s139, %s141
      %p145 = scmp.eq.s32.totalorder %s21, 0
      %p146 = por %p144, %p145
      %p147 = scmp.ne.s32.totalorder %s139, %s141
      %p148 = scmp.eq.s32.totalorder %s26, 1
      %p149 = por %p147, %p148
      %p150 = scmp.ne.s32.totalorder %s141, %s142
      %p151 = scmp.eq.s32.totalorder %s26, 0
      %p152 = por %p150, %p151
      %p153 = scmp.ne.s32.totalorder %s141, %s142
      %p154 = scmp.eq.s32.totalorder %s27, 1
      %p155 = por %p153, %p154
      %p157 = scmp.ne.s32.totalorder %s142, %s156
      %p158 = scmp.eq.s32.totalorder %s27, 0
      %p159 = por %p157, %p158
      %s161 = sadd.s32 %s160, 1
      %p164 = scmp.eq.s32.totalorder %s21, 1
      %p165 = scmp.ne.s32.totalorder %s160, %s162
      %p166 = scmp.eq.s32.totalorder %s21, 0
      %p167 = por %p165, %p166
      %p168 = scmp.ne.s32.totalorder %s160, %s162
      %p169 = scmp.eq.s32.totalorder %s26, 1
      %p170 = por %p168, %p169
      %p171 = scmp.ne.s32.totalorder %s162, %s163
      %p172 = scmp.eq.s32.totalorder %s26, 0
      %p173 = por %p171, %p172
      %p174 = scmp.ne.s32.totalorder %s162, %s163
      %p175 = scmp.eq.s32.totalorder %s27, 1
      %p176 = por %p174, %p175
      %p178 = scmp.ne.s32.totalorder %s163, %s177
      %p179 = scmp.eq.s32.totalorder %s27, 0
      %p180 = por %p178, %p179
      %s181 = ssub.s32 %s21, %s28
      %p182 = scmp.eq.s32.totalorder %s181, 0
      %s184 = sadd.s32 %s183, 1
      %s185 = scalar_select %p182, %s183, %s184
      %p188 = pneg %p182
      %p189 = scmp.eq.s32.totalorder %s21, 1
      %p190 = por %p188, %p189
      %p191 = scmp.ne.s32.totalorder %s183, %s186
      %p192 = scmp.eq.s32.totalorder %s21, 0
      %p193 = por %p191, %p192
      %p194 = scmp.ne.s32.totalorder %s183, %s186
      %p195 = scmp.eq.s32.totalorder %s26, 1
      %p196 = por %p194, %p195
      %p197 = scmp.ne.s32.totalorder %s186, %s187
      %p198 = scmp.eq.s32.totalorder %s26, 0
      %p199 = por %p197, %p198
      %p200 = scmp.ne.s32.totalorder %s186, %s187
      %p201 = scmp.eq.s32.totalorder %s27, 1
      %p202 = por %p200, %p201
      %p204 = scmp.ne.s32.totalorder %s187, %s203
      %p205 = scmp.eq.s32.totalorder %s27, 0
      %p206 = por %p204, %p205
      %p207 = scmp.le.s32.totalorder 1, %s21
      %p208 = scmp.lt.s32.totalorder %s21, 3
      %p209 = pnand %p207, %p208
      %p210 = pneg %p209
      // Predicated region
      $region9: #{tpu_custom_call.1} parent=5 // pred_check
        _
      $region10: #{tpu_custom_call.1} parent=5 // pred_check_branch
        %212 = sbr.rel (%p209) target = $region12
      $region11: #{tpu_custom_call.1} parent=5 // pred_region
        %s213 = ssub.s32 %s21, 1
        // Predicated region
        $region13: #{tpu_custom_call.1} parent=11 // pred_check
          %p214 = pneg %p68
        $region14: #{tpu_custom_call.1} parent=11 // pred_check_branch
          %216 = sbr.rel (%p214) target = $region16
        $region15: #{tpu_custom_call.1} parent=11 // pred_region
          %s218 = ssub.s32 16384, 16384
          %219 = vsyncadd [#allocation6], %s218
          %s220 = sshll.u32 [#allocation5], 4
          %s221 = int_to_ptr.vmem [resolvable:$true] %s220
          %226 = dma.hbm_to_vmem [thread:$0]  %s1, 16384, %s221, [#allocation6], 512, 512, 32
        $region16: #{tpu_custom_call.1} parent=11 // pred_fallthru
          _
        // Predicated region
        $region17: #{tpu_custom_call.1} parent=11 // pred_check
          %p227 = pneg %p89
        $region18: #{tpu_custom_call.1} parent=11 // pred_check_branch
          %229 = sbr.rel (%p227) target = $region20
        $region19: #{tpu_custom_call.1} parent=11 // pred_region
          _
        $region20: #{tpu_custom_call.1} parent=11 // pred_fallthru
          _
        // Predicated region
        $region21: #{tpu_custom_call.1} parent=11 // pred_check
          %p230 = pneg %p110
        $region22: #{tpu_custom_call.1} parent=11 // pred_check_branch
          %232 = sbr.rel (%p230) target = $region24
        $region23: #{tpu_custom_call.1} parent=11 // pred_region
          %s234 = ssub.s32 32768, 32768
          %235 = vsyncadd [#allocation6], %s234
          %s236 = sshll.u32 [#allocation7], 4
          %s237 = int_to_ptr.vmem [resolvable:$true] %s236
          %242 = dma.hbm_to_vmem [thread:$0]  %s3, 32768, %s237, [#allocation6], 512, 512, 32
        $region24: #{tpu_custom_call.1} parent=11 // pred_fallthru
          _
        // Predicated region
        $region25: #{tpu_custom_call.1} parent=11 // pred_check
          %p243 = pneg %p131
        $region26: #{tpu_custom_call.1} parent=11 // pred_check_branch
          %245 = sbr.rel (%p243) target = $region28
        $region27: #{tpu_custom_call.1} parent=11 // pred_region
          _
        $region28: #{tpu_custom_call.1} parent=11 // pred_fallthru
          _
        // Predicated region
        $region29: #{tpu_custom_call.1} parent=11 // pred_check
          %p246 = pneg %p152
        $region30: #{tpu_custom_call.1} parent=11 // pred_check_branch
          %248 = sbr.rel (%p246) target = $region32
        $region31: #{tpu_custom_call.1} parent=11 // pred_region
          %s250 = ssub.s32 8192, 8192
          %251 = vsyncadd [#allocation9], %s250
          %s252 = sshll.u32 [#allocation8], 4
          %s253 = int_to_ptr.vmem [resolvable:$true] %s252
          %258 = dma.hbm_to_vmem [thread:$0]  %s5, 8192, %s253, [#allocation9], 128, 128, 8
        $region32: #{tpu_custom_call.1} parent=11 // pred_fallthru
          _
        // Predicated region
        $region33: #{tpu_custom_call.1} parent=11 // pred_check
          %p259 = pneg %p173
        $region34: #{tpu_custom_call.1} parent=11 // pred_check_branch
          %261 = sbr.rel (%p259) target = $region36
        $region35: #{tpu_custom_call.1} parent=11 // pred_region
          _
        $region36: #{tpu_custom_call.1} parent=11 // pred_fallthru
          _
      $region12: #{tpu_custom_call.1} parent=5 // pred_fallthru
        _
      %p262 = scmp.lt.s32.totalorder %s21, 2
      // Predicated region
      $region37: #{tpu_custom_call.1} parent=5 // pred_check
        %p263 = pneg %p262
      $region38: #{tpu_custom_call.1} parent=5 // pred_check_branch
        %265 = sbr.rel (%p263) target = $region40
      $region39: #{tpu_custom_call.1} parent=5 // pred_region
        // Predicated region
        $region41: #{tpu_custom_call.1} parent=39 // pred_check
          %p266 = pneg %p41
        $region42: #{tpu_custom_call.1} parent=39 // pred_check_branch
          %268 = sbr.rel (%p266) target = $region44
        $region43: #{tpu_custom_call.1} parent=39 // pred_region
          %s269 = sand.u32 %s31, 1
          %s270 = scalar_lea.sflag [#allocation3], %s269
          %s271 = sand.u32 %s31, 1
          %s272 = smul.addr %s271, 32
          %s273 = scalar_lea.vmem [#allocation2], %s272
          %s274 = smul.u32 2, %s21
          %s276 = ssub.s32 512, 512
          %277 = vsyncadd %s270, %s276
          %s278 = smul.addr %s274, 2
          %s279 = smul.addr %s278, 128
          %s280 = scalar_lea.hbm %s0, %s279
          %s281 = sshll.u32 %s273, 4
          %s282 = int_to_ptr.vmem [resolvable:$true] %s281
          %287 = dma.hbm_to_vmem [thread:$0]  %s280, 512, %s282, %s270, 256, 256, 16
        $region44: #{tpu_custom_call.1} parent=39 // pred_fallthru
          _
      $region40: #{tpu_custom_call.1} parent=5 // pred_fallthru
        _
      %p288 = scmp.le.s32.totalorder 1, %s21
      %p289 = scmp.lt.s32.totalorder %s21, 3
      %p290 = pnand %p288, %p289
      %p291 = pneg %p290
      // Predicated region
      $region45: #{tpu_custom_call.1} parent=5 // pred_check
        _
      $region46: #{tpu_custom_call.1} parent=5 // pred_check_branch
        %293 = sbr.rel (%p290) target = $region48
      $region47: #{tpu_custom_call.1} parent=5 // pred_region
        %s294 = ssub.s32 %s21, 1
        %s295 = sand.u32 %s34, 1
        %s296 = scalar_lea.sflag [#allocation3], %s295
        %s297 = sand.u32 %s34, 1
        %s298 = smul.addr %s297, 32
        %s299 = scalar_lea.vmem [#allocation2], %s298
        // Predicated region
        $region49: #{tpu_custom_call.1} parent=47 // pred_check
          %p300 = pneg %p47
        $region50: #{tpu_custom_call.1} parent=47 // pred_check_branch
          %302 = sbr.rel (%p300) target = $region52
        $region51: #{tpu_custom_call.1} parent=47 // pred_region
          %303 = dma.done %s296, 512
        $region52: #{tpu_custom_call.1} parent=47 // pred_fallthru
          _
        // Predicated region
        $region53: #{tpu_custom_call.1} parent=47 // pred_check
          %p304 = pneg %p68
        $region54: #{tpu_custom_call.1} parent=47 // pred_check_branch
          %306 = sbr.rel (%p304) target = $region56
        $region55: #{tpu_custom_call.1} parent=47 // pred_region
          %307 = dma.done [#allocation6], 16384
        $region56: #{tpu_custom_call.1} parent=47 // pred_fallthru
          _
        // Predicated region
        $region57: #{tpu_custom_call.1} parent=47 // pred_check
          %p308 = pneg %p110
        $region58: #{tpu_custom_call.1} parent=47 // pred_check_branch
          %310 = sbr.rel (%p308) target = $region60
        $region59: #{tpu_custom_call.1} parent=47 // pred_region
          %311 = dma.done [#allocation6], 32768
        $region60: #{tpu_custom_call.1} parent=47 // pred_fallthru
          _
        // Predicated region
        $region61: #{tpu_custom_call.1} parent=47 // pred_check
          %p312 = pneg %p152
        $region62: #{tpu_custom_call.1} parent=47 // pred_check_branch
          %314 = sbr.rel (%p312) target = $region64
        $region63: #{tpu_custom_call.1} parent=47 // pred_region
          %315 = dma.done [#allocation9], 8192
        $region64: #{tpu_custom_call.1} parent=47 // pred_fallthru
          _
        %s316 = sand.u32 %s34, 1
        %s317 = scalar_lea.sflag [#allocation3], %s316
        %s318 = sand.u32 %s34, 1
        %s319 = smul.addr %s318, 32
        %s320 = scalar_lea.vmem [#allocation2], %s319
        %p321 = pneg %p47
        %p322 = pneg %p44
        %p323 = pneg %p68
        %p324 = pneg %p65
        %p325 = pneg %p89
        %p326 = pneg %p86
        %p327 = pneg %p110
        %p328 = pneg %p107
        %p329 = pneg %p131
        %p330 = pneg %p128
        %p331 = pneg %p152
        %p332 = pneg %p149
        %p333 = pneg %p173
        %p334 = pneg %p170
        %p335 = pneg %p199
        %p336 = pneg %p196
        %s337 = sand.u32 %s186, 1
        %s338 = scalar_lea.sflag [#allocation4], %s337
        %s339 = sand.u32 %s186, 1
        %s340 = smul.addr %s339, 16
        %s341 = scalar_lea.vmem [#allocation10], %s340
        %s342 = smul.u32 2, %s26
        %s343 = smul.u32 2, %s26
        %v344 = vld [vmem:[#allocation5] sm:$0xff]
        %v345 = vld [vmem:[#allocation5 + $0x8] sm:$0xff]
        %v346 = vld [vmem:[#allocation5 + $0x10] sm:$0xff]
        %v347 = vld [vmem:[#allocation5 + $0x18] sm:$0xff]
        %v348 = vld [vmem:[#allocation5 + $0x20] sm:$0xff]
        %v349 = vld [vmem:[#allocation5 + $0x28] sm:$0xff]
        %v350 = vld [vmem:[#allocation5 + $0x30] sm:$0xff]
        %v351 = vld [vmem:[#allocation5 + $0x38] sm:$0xff]
        %v352 = vld [vmem:[#allocation5 + $0x40] sm:$0xff]
        %v353 = vld [vmem:[#allocation5 + $0x48] sm:$0xff]
        %v354 = vld [vmem:[#allocation5 + $0x50] sm:$0xff]
        %v355 = vld [vmem:[#allocation5 + $0x58] sm:$0xff]
        %v356 = vld [vmem:[#allocation5 + $0x60] sm:$0xff]
        %v357 = vld [vmem:[#allocation5 + $0x68] sm:$0xff]
        %v358 = vld [vmem:[#allocation5 + $0x70] sm:$0xff]
        %v359 = vld [vmem:[#allocation5 + $0x78] sm:$0xff]
        %v360 = vld [vmem:[#allocation5 + $0x80] sm:$0xff]
        %v361 = vld [vmem:[#allocation5 + $0x88] sm:$0xff]
        %v362 = vld [vmem:[#allocation5 + $0x90] sm:$0xff]
        %v363 = vld [vmem:[#allocation5 + $0x98] sm:$0xff]
        %v364 = vld [vmem:[#allocation5 + $0xa0] sm:$0xff]
        %v365 = vld [vmem:[#allocation5 + $0xa8] sm:$0xff]
        %v366 = vld [vmem:[#allocation5 + $0xb0] sm:$0xff]
        %v367 = vld [vmem:[#allocation5 + $0xb8] sm:$0xff]
        %v368 = vld [vmem:[#allocation5 + $0xc0] sm:$0xff]
        %v369 = vld [vmem:[#allocation5 + $0xc8] sm:$0xff]
        %v370 = vld [vmem:[#allocation5 + $0xd0] sm:$0xff]
        %v371 = vld [vmem:[#allocation5 + $0xd8] sm:$0xff]
        %v372 = vld [vmem:[#allocation5 + $0xe0] sm:$0xff]
        %v373 = vld [vmem:[#allocation5 + $0xe8] sm:$0xff]
        %v374 = vld [vmem:[#allocation5 + $0xf0] sm:$0xff]
        %v375 = vld [vmem:[#allocation5 + $0xf8] sm:$0xff]
        %v376 = vld [vmem:[#allocation5 + $0x100] sm:$0xff]
        %v377 = vld [vmem:[#allocation5 + $0x108] sm:$0xff]
        %v378 = vld [vmem:[#allocation5 + $0x110] sm:$0xff]
        %v379 = vld [vmem:[#allocation5 + $0x118] sm:$0xff]
        %v380 = vld [vmem:[#allocation5 + $0x120] sm:$0xff]
        %v381 = vld [vmem:[#allocation5 + $0x128] sm:$0xff]
        %v382 = vld [vmem:[#allocation5 + $0x130] sm:$0xff]
        %v383 = vld [vmem:[#allocation5 + $0x138] sm:$0xff]
        %v384 = vld [vmem:[#allocation5 + $0x140] sm:$0xff]
        %v385 = vld [vmem:[#allocation5 + $0x148] sm:$0xff]
        %v386 = vld [vmem:[#allocation5 + $0x150] sm:$0xff]
        %v387 = vld [vmem:[#allocation5 + $0x158] sm:$0xff]
        %v388 = vld [vmem:[#allocation5 + $0x160] sm:$0xff]
        %v389 = vld [vmem:[#allocation5 + $0x168] sm:$0xff]
        %v390 = vld [vmem:[#allocation5 + $0x170] sm:$0xff]
        %v391 = vld [vmem:[#allocation5 + $0x178] sm:$0xff]
        %v392 = vld [vmem:[#allocation5 + $0x180] sm:$0xff]
        %v393 = vld [vmem:[#allocation5 + $0x188] sm:$0xff]
        %v394 = vld [vmem:[#allocation5 + $0x190] sm:$0xff]
        %v395 = vld [vmem:[#allocation5 + $0x198] sm:$0xff]
        %v396 = vld [vmem:[#allocation5 + $0x1a0] sm:$0xff]
        %v397 = vld [vmem:[#allocation5 + $0x1a8] sm:$0xff]
        %v398 = vld [vmem:[#allocation5 + $0x1b0] sm:$0xff]
        %v399 = vld [vmem:[#allocation5 + $0x1b8] sm:$0xff]
        %v400 = vld [vmem:[#allocation5 + $0x1c0] sm:$0xff]
        %v401 = vld [vmem:[#allocation5 + $0x1c8] sm:$0xff]
        %v402 = vld [vmem:[#allocation5 + $0x1d0] sm:$0xff]
        %v403 = vld [vmem:[#allocation5 + $0x1d8] sm:$0xff]
        %v404 = vld [vmem:[#allocation5 + $0x1e0] sm:$0xff]
        %v405 = vld [vmem:[#allocation5 + $0x1e8] sm:$0xff]
        %v406 = vld [vmem:[#allocation5 + $0x1f0] sm:$0xff]
        %v407 = vld [vmem:[#allocation5 + $0x1f8] sm:$0xff]
        %v408 = vld [vmem:[#allocation5 + $0x200] sm:$0xff]
        %v409 = vld [vmem:[#allocation5 + $0x208] sm:$0xff]
        %v410 = vld [vmem:[#allocation5 + $0x210] sm:$0xff]
        %v411 = vld [vmem:[#allocation5 + $0x218] sm:$0xff]
        %v412 = vld [vmem:[#allocation5 + $0x220] sm:$0xff]
        %v413 = vld [vmem:[#allocation5 + $0x228] sm:$0xff]
        %v414 = vld [vmem:[#allocation5 + $0x230] sm:$0xff]
        %v415 = vld [vmem:[#allocation5 + $0x238] sm:$0xff]
        %v416 = vld [vmem:[#allocation5 + $0x240] sm:$0xff]
        %v417 = vld [vmem:[#allocation5 + $0x248] sm:$0xff]
        %v418 = vld [vmem:[#allocation5 + $0x250] sm:$0xff]
        %v419 = vld [vmem:[#allocation5 + $0x258] sm:$0xff]
        %v420 = vld [vmem:[#allocation5 + $0x260] sm:$0xff]
        %v421 = vld [vmem:[#allocation5 + $0x268] sm:$0xff]
        %v422 = vld [vmem:[#allocation5 + $0x270] sm:$0xff]
        %v423 = vld [vmem:[#allocation5 + $0x278] sm:$0xff]
        %v424 = vld [vmem:[#allocation5 + $0x280] sm:$0xff]
        %v425 = vld [vmem:[#allocation5 + $0x288] sm:$0xff]
        %v426 = vld [vmem:[#allocation5 + $0x290] sm:$0xff]
        %v427 = vld [vmem:[#allocation5 + $0x298] sm:$0xff]
        %v428 = vld [vmem:[#allocation5 + $0x2a0] sm:$0xff]
        %v429 = vld [vmem:[#allocation5 + $0x2a8] sm:$0xff]
        %v430 = vld [vmem:[#allocation5 + $0x2b0] sm:$0xff]
        %v431 = vld [vmem:[#allocation5 + $0x2b8] sm:$0xff]
        %v432 = vld [vmem:[#allocation5 + $0x2c0] sm:$0xff]
        %v433 = vld [vmem:[#allocation5 + $0x2c8] sm:$0xff]
        %v434 = vld [vmem:[#allocation5 + $0x2d0] sm:$0xff]
        %v435 = vld [vmem:[#allocation5 + $0x2d8] sm:$0xff]
        %v436 = vld [vmem:[#allocation5 + $0x2e0] sm:$0xff]
        %v437 = vld [vmem:[#allocation5 + $0x2e8] sm:$0xff]
        %v438 = vld [vmem:[#allocation5 + $0x2f0] sm:$0xff]
        %v439 = vld [vmem:[#allocation5 + $0x2f8] sm:$0xff]
        %v440 = vld [vmem:[#allocation5 + $0x300] sm:$0xff]
        %v441 = vld [vmem:[#allocation5 + $0x308] sm:$0xff]
        %v442 = vld [vmem:[#allocation5 + $0x310] sm:$0xff]
        %v443 = vld [vmem:[#allocation5 + $0x318] sm:$0xff]
        %v444 = vld [vmem:[#allocation5 + $0x320] sm:$0xff]
        %v445 = vld [vmem:[#allocation5 + $0x328] sm:$0xff]
        %v446 = vld [vmem:[#allocation5 + $0x330] sm:$0xff]
        %v447 = vld [vmem:[#allocation5 + $0x338] sm:$0xff]
        %v448 = vld [vmem:[#allocation5 + $0x340] sm:$0xff]
        %v449 = vld [vmem:[#allocation5 + $0x348] sm:$0xff]
        %v450 = vld [vmem:[#allocation5 + $0x350] sm:$0xff]
        %v451 = vld [vmem:[#allocation5 + $0x358] sm:$0xff]
        %v452 = vld [vmem:[#allocation5 + $0x360] sm:$0xff]
        %v453 = vld [vmem:[#allocation5 + $0x368] sm:$0xff]
        %v454 = vld [vmem:[#allocation5 + $0x370] sm:$0xff]
        %v455 = vld [vmem:[#allocation5 + $0x378] sm:$0xff]
        %v456 = vld [vmem:[#allocation5 + $0x380] sm:$0xff]
        %v457 = vld [vmem:[#allocation5 + $0x388] sm:$0xff]
        %v458 = vld [vmem:[#allocation5 + $0x390] sm:$0xff]
        %v459 = vld [vmem:[#allocation5 + $0x398] sm:$0xff]
        %v460 = vld [vmem:[#allocation5 + $0x3a0] sm:$0xff]
        %v461 = vld [vmem:[#allocation5 + $0x3a8] sm:$0xff]
        %v462 = vld [vmem:[#allocation5 + $0x3b0] sm:$0xff]
        %v463 = vld [vmem:[#allocation5 + $0x3b8] sm:$0xff]
        %v464 = vld [vmem:[#allocation5 + $0x3c0] sm:$0xff]
        %v465 = vld [vmem:[#allocation5 + $0x3c8] sm:$0xff]
        %v466 = vld [vmem:[#allocation5 + $0x3d0] sm:$0xff]
        %v467 = vld [vmem:[#allocation5 + $0x3d8] sm:$0xff]
        %v468 = vld [vmem:[#allocation5 + $0x3e0] sm:$0xff]
        %v469 = vld [vmem:[#allocation5 + $0x3e8] sm:$0xff]
        %v470 = vld [vmem:[#allocation5 + $0x3f0] sm:$0xff]
        %v471 = vld [vmem:[#allocation5 + $0x3f8] sm:$0xff]
        %v472 = vld [vmem:[#allocation7] sm:$0xff]
        %v473 = vld [vmem:[#allocation7 + $0x8] sm:$0xff]
        %v474 = vld [vmem:[#allocation7 + $0x10] sm:$0xff]
        %v475 = vld [vmem:[#allocation7 + $0x18] sm:$0xff]
        %v476 = vld [vmem:[#allocation7 + $0x20] sm:$0xff]
        %v477 = vld [vmem:[#allocation7 + $0x28] sm:$0xff]
        %v478 = vld [vmem:[#allocation7 + $0x30] sm:$0xff]
        %v479 = vld [vmem:[#allocation7 + $0x38] sm:$0xff]
        %v480 = vld [vmem:[#allocation7 + $0x40] sm:$0xff]
        %v481 = vld [vmem:[#allocation7 + $0x48] sm:$0xff]
        %v482 = vld [vmem:[#allocation7 + $0x50] sm:$0xff]
        %v483 = vld [vmem:[#allocation7 + $0x58] sm:$0xff]
        %v484 = vld [vmem:[#allocation7 + $0x60] sm:$0xff]
        %v485 = vld [vmem:[#allocation7 + $0x68] sm:$0xff]
        %v486 = vld [vmem:[#allocation7 + $0x70] sm:$0xff]
        %v487 = vld [vmem:[#allocation7 + $0x78] sm:$0xff]
        %v488 = vld [vmem:[#allocation7 + $0x80] sm:$0xff]
        %v489 = vld [vmem:[#allocation7 + $0x88] sm:$0xff]
        %v490 = vld [vmem:[#allocation7 + $0x90] sm:$0xff]
        %v491 = vld [vmem:[#allocation7 + $0x98] sm:$0xff]
        %v492 = vld [vmem:[#allocation7 + $0xa0] sm:$0xff]
        %v493 = vld [vmem:[#allocation7 + $0xa8] sm:$0xff]
        %v494 = vld [vmem:[#allocation7 + $0xb0] sm:$0xff]
        %v495 = vld [vmem:[#allocation7 + $0xb8] sm:$0xff]
        %v496 = vld [vmem:[#allocation7 + $0xc0] sm:$0xff]
        %v497 = vld [vmem:[#allocation7 + $0xc8] sm:$0xff]
        %v498 = vld [vmem:[#allocation7 + $0xd0] sm:$0xff]
        %v499 = vld [vmem:[#allocation7 + $0xd8] sm:$0xff]
        %v500 = vld [vmem:[#allocation7 + $0xe0] sm:$0xff]
        %v501 = vld [vmem:[#allocation7 + $0xe8] sm:$0xff]
        %v502 = vld [vmem:[#allocation7 + $0xf0] sm:$0xff]
        %v503 = vld [vmem:[#allocation7 + $0xf8] sm:$0xff]
        %v504 = vld [vmem:[#allocation7 + $0x100] sm:$0xff]
        %v505 = vld [vmem:[#allocation7 + $0x108] sm:$0xff]
        %v506 = vld [vmem:[#allocation7 + $0x110] sm:$0xff]
        %v507 = vld [vmem:[#allocation7 + $0x118] sm:$0xff]
        %v508 = vld [vmem:[#allocation7 + $0x120] sm:$0xff]
        %v509 = vld [vmem:[#allocation7 + $0x128] sm:$0xff]
        %v510 = vld [vmem:[#allocation7 + $0x130] sm:$0xff]
        %v511 = vld [vmem:[#allocation7 + $0x138] sm:$0xff]
        %v512 = vld [vmem:[#allocation7 + $0x140] sm:$0xff]
        %v513 = vld [vmem:[#allocation7 + $0x148] sm:$0xff]
        %v514 = vld [vmem:[#allocation7 + $0x150] sm:$0xff]
        %v515 = vld [vmem:[#allocation7 + $0x158] sm:$0xff]
        %v516 = vld [vmem:[#allocation7 + $0x160] sm:$0xff]
        %v517 = vld [vmem:[#allocation7 + $0x168] sm:$0xff]
        %v518 = vld [vmem:[#allocation7 + $0x170] sm:$0xff]
        %v519 = vld [vmem:[#allocation7 + $0x178] sm:$0xff]
        %v520 = vld [vmem:[#allocation7 + $0x180] sm:$0xff]
        %v521 = vld [vmem:[#allocation7 + $0x188] sm:$0xff]
        %v522 = vld [vmem:[#allocation7 + $0x190] sm:$0xff]
        %v523 = vld [vmem:[#allocation7 + $0x198] sm:$0xff]
        %v524 = vld [vmem:[#allocation7 + $0x1a0] sm:$0xff]
        %v525 = vld [vmem:[#allocation7 + $0x1a8] sm:$0xff]
        %v526 = vld [vmem:[#allocation7 + $0x1b0] sm:$0xff]
        %v527 = vld [vmem:[#allocation7 + $0x1b8] sm:$0xff]
        %v528 = vld [vmem:[#allocation7 + $0x1c0] sm:$0xff]
        %v529 = vld [vmem:[#allocation7 + $0x1c8] sm:$0xff]
        %v530 = vld [vmem:[#allocation7 + $0x1d0] sm:$0xff]
        %v531 = vld [vmem:[#allocation7 + $0x1d8] sm:$0xff]
        %v532 = vld [vmem:[#allocation7 + $0x1e0] sm:$0xff]
        %v533 = vld [vmem:[#allocation7 + $0x1e8] sm:$0xff]
        %v534 = vld [vmem:[#allocation7 + $0x1f0] sm:$0xff]
        %v535 = vld [vmem:[#allocation7 + $0x1f8] sm:$0xff]
        %v536 = vld [vmem:[#allocation7 + $0x200] sm:$0xff]
        %v537 = vld [vmem:[#allocation7 + $0x208] sm:$0xff]
        %v538 = vld [vmem:[#allocation7 + $0x210] sm:$0xff]
        %v539 = vld [vmem:[#allocation7 + $0x218] sm:$0xff]
        %v540 = vld [vmem:[#allocation7 + $0x220] sm:$0xff]
        %v541 = vld [vmem:[#allocation7 + $0x228] sm:$0xff]
        %v542 = vld [vmem:[#allocation7 + $0x230] sm:$0xff]
        %v543 = vld [vmem:[#allocation7 + $0x238] sm:$0xff]
        %v544 = vld [vmem:[#allocation7 + $0x240] sm:$0xff]
        %v545 = vld [vmem:[#allocation7 + $0x248] sm:$0xff]
        %v546 = vld [vmem:[#allocation7 + $0x250] sm:$0xff]
        %v547 = vld [vmem:[#allocation7 + $0x258] sm:$0xff]
        %v548 = vld [vmem:[#allocation7 + $0x260] sm:$0xff]
        %v549 = vld [vmem:[#allocation7 + $0x268] sm:$0xff]
        %v550 = vld [vmem:[#allocation7 + $0x270] sm:$0xff]
        %v551 = vld [vmem:[#allocation7 + $0x278] sm:$0xff]
        %v552 = vld [vmem:[#allocation7 + $0x280] sm:$0xff]
        %v553 = vld [vmem:[#allocation7 + $0x288] sm:$0xff]
        %v554 = vld [vmem:[#allocation7 + $0x290] sm:$0xff]
        %v555 = vld [vmem:[#allocation7 + $0x298] sm:$0xff]
        %v556 = vld [vmem:[#allocation7 + $0x2a0] sm:$0xff]
        %v557 = vld [vmem:[#allocation7 + $0x2a8] sm:$0xff]
        %v558 = vld [vmem:[#allocation7 + $0x2b0] sm:$0xff]
        %v559 = vld [vmem:[#allocation7 + $0x2b8] sm:$0xff]
        %v560 = vld [vmem:[#allocation7 + $0x2c0] sm:$0xff]
        %v561 = vld [vmem:[#allocation7 + $0x2c8] sm:$0xff]
        %v562 = vld [vmem:[#allocation7 + $0x2d0] sm:$0xff]
        %v563 = vld [vmem:[#allocation7 + $0x2d8] sm:$0xff]
        %v564 = vld [vmem:[#allocation7 + $0x2e0] sm:$0xff]
        %v565 = vld [vmem:[#allocation7 + $0x2e8] sm:$0xff]
        %v566 = vld [vmem:[#allocation7 + $0x2f0] sm:$0xff]
        %v567 = vld [vmem:[#allocation7 + $0x2f8] sm:$0xff]
        %v568 = vld [vmem:[#allocation7 + $0x300] sm:$0xff]
        %v569 = vld [vmem:[#allocation7 + $0x308] sm:$0xff]
        %v570 = vld [vmem:[#allocation7 + $0x310] sm:$0xff]
        %v571 = vld [vmem:[#allocation7 + $0x318] sm:$0xff]
        %v572 = vld [vmem:[#allocation7 + $0x320] sm:$0xff]
        %v573 = vld [vmem:[#allocation7 + $0x328] sm:$0xff]
        %v574 = vld [vmem:[#allocation7 + $0x330] sm:$0xff]
        %v575 = vld [vmem:[#allocation7 + $0x338] sm:$0xff]
        %v576 = vld [vmem:[#allocation7 + $0x340] sm:$0xff]
        %v577 = vld [vmem:[#allocation7 + $0x348] sm:$0xff]
        %v578 = vld [vmem:[#allocation7 + $0x350] sm:$0xff]
        %v579 = vld [vmem:[#allocation7 + $0x358] sm:$0xff]
        %v580 = vld [vmem:[#allocation7 + $0x360] sm:$0xff]
        %v581 = vld [vmem:[#allocation7 + $0x368] sm:$0xff]
        %v582 = vld [vmem:[#allocation7 + $0x370] sm:$0xff]
        %v583 = vld [vmem:[#allocation7 + $0x378] sm:$0xff]
        %v584 = vld [vmem:[#allocation7 + $0x380] sm:$0xff]
        %v585 = vld [vmem:[#allocation7 + $0x388] sm:$0xff]
        %v586 = vld [vmem:[#allocation7 + $0x390] sm:$0xff]
        %v587 = vld [vmem:[#allocation7 + $0x398] sm:$0xff]
        %v588 = vld [vmem:[#allocation7 + $0x3a0] sm:$0xff]
        %v589 = vld [vmem:[#allocation7 + $0x3a8] sm:$0xff]
        %v590 = vld [vmem:[#allocation7 + $0x3b0] sm:$0xff]
        %v591 = vld [vmem:[#allocation7 + $0x3b8] sm:$0xff]
        %v592 = vld [vmem:[#allocation7 + $0x3c0] sm:$0xff]
        %v593 = vld [vmem:[#allocation7 + $0x3c8] sm:$0xff]
        %v594 = vld [vmem:[#allocation7 + $0x3d0] sm:$0xff]
        %v595 = vld [vmem:[#allocation7 + $0x3d8] sm:$0xff]
        %v596 = vld [vmem:[#allocation7 + $0x3e0] sm:$0xff]
        %v597 = vld [vmem:[#allocation7 + $0x3e8] sm:$0xff]
        %v598 = vld [vmem:[#allocation7 + $0x3f0] sm:$0xff]
        %v599 = vld [vmem:[#allocation7 + $0x3f8] sm:$0xff]
        %v600 = vld [vmem:[#allocation7 + $0x400] sm:$0xff]
        %v601 = vld [vmem:[#allocation7 + $0x408] sm:$0xff]
        %v602 = vld [vmem:[#allocation7 + $0x410] sm:$0xff]
        %v603 = vld [vmem:[#allocation7 + $0x418] sm:$0xff]
        %v604 = vld [vmem:[#allocation7 + $0x420] sm:$0xff]
        %v605 = vld [vmem:[#allocation7 + $0x428] sm:$0xff]
        %v606 = vld [vmem:[#allocation7 + $0x430] sm:$0xff]
        %v607 = vld [vmem:[#allocation7 + $0x438] sm:$0xff]
        %v608 = vld [vmem:[#allocation7 + $0x440] sm:$0xff]
        %v609 = vld [vmem:[#allocation7 + $0x448] sm:$0xff]
        %v610 = vld [vmem:[#allocation7 + $0x450] sm:$0xff]
        %v611 = vld [vmem:[#allocation7 + $0x458] sm:$0xff]
        %v612 = vld [vmem:[#allocation7 + $0x460] sm:$0xff]
        %v613 = vld [vmem:[#allocation7 + $0x468] sm:$0xff]
        %v614 = vld [vmem:[#allocation7 + $0x470] sm:$0xff]
        %v615 = vld [vmem:[#allocation7 + $0x478] sm:$0xff]
        %v616 = vld [vmem:[#allocation7 + $0x480] sm:$0xff]
        %v617 = vld [vmem:[#allocation7 + $0x488] sm:$0xff]
        %v618 = vld [vmem:[#allocation7 + $0x490] sm:$0xff]
        %v619 = vld [vmem:[#allocation7 + $0x498] sm:$0xff]
        %v620 = vld [vmem:[#allocation7 + $0x4a0] sm:$0xff]
        %v621 = vld [vmem:[#allocation7 + $0x4a8] sm:$0xff]
        %v622 = vld [vmem:[#allocation7 + $0x4b0] sm:$0xff]
        %v623 = vld [vmem:[#allocation7 + $0x4b8] sm:$0xff]
        %v624 = vld [vmem:[#allocation7 + $0x4c0] sm:$0xff]
        %v625 = vld [vmem:[#allocation7 + $0x4c8] sm:$0xff]
        %v626 = vld [vmem:[#allocation7 + $0x4d0] sm:$0xff]
        %v627 = vld [vmem:[#allocation7 + $0x4d8] sm:$0xff]
        %v628 = vld [vmem:[#allocation7 + $0x4e0] sm:$0xff]
        %v629 = vld [vmem:[#allocation7 + $0x4e8] sm:$0xff]
        %v630 = vld [vmem:[#allocation7 + $0x4f0] sm:$0xff]
        %v631 = vld [vmem:[#allocation7 + $0x4f8] sm:$0xff]
        %v632 = vld [vmem:[#allocation7 + $0x500] sm:$0xff]
        %v633 = vld [vmem:[#allocation7 + $0x508] sm:$0xff]
        %v634 = vld [vmem:[#allocation7 + $0x510] sm:$0xff]
        %v635 = vld [vmem:[#allocation7 + $0x518] sm:$0xff]
        %v636 = vld [vmem:[#allocation7 + $0x520] sm:$0xff]
        %v637 = vld [vmem:[#allocation7 + $0x528] sm:$0xff]
        %v638 = vld [vmem:[#allocation7 + $0x530] sm:$0xff]
        %v639 = vld [vmem:[#allocation7 + $0x538] sm:$0xff]
        %v640 = vld [vmem:[#allocation7 + $0x540] sm:$0xff]
        %v641 = vld [vmem:[#allocation7 + $0x548] sm:$0xff]
        %v642 = vld [vmem:[#allocation7 + $0x550] sm:$0xff]
        %v643 = vld [vmem:[#allocation7 + $0x558] sm:$0xff]
        %v644 = vld [vmem:[#allocation7 + $0x560] sm:$0xff]
        %v645 = vld [vmem:[#allocation7 + $0x568] sm:$0xff]
        %v646 = vld [vmem:[#allocation7 + $0x570] sm:$0xff]
        %v647 = vld [vmem:[#allocation7 + $0x578] sm:$0xff]
        %v648 = vld [vmem:[#allocation7 + $0x580] sm:$0xff]
        %v649 = vld [vmem:[#allocation7 + $0x588] sm:$0xff]
        %v650 = vld [vmem:[#allocation7 + $0x590] sm:$0xff]
        %v651 = vld [vmem:[#allocation7 + $0x598] sm:$0xff]
        %v652 = vld [vmem:[#allocation7 + $0x5a0] sm:$0xff]
        %v653 = vld [vmem:[#allocation7 + $0x5a8] sm:$0xff]
        %v654 = vld [vmem:[#allocation7 + $0x5b0] sm:$0xff]
        %v655 = vld [vmem:[#allocation7 + $0x5b8] sm:$0xff]
        %v656 = vld [vmem:[#allocation7 + $0x5c0] sm:$0xff]
        %v657 = vld [vmem:[#allocation7 + $0x5c8] sm:$0xff]
        %v658 = vld [vmem:[#allocation7 + $0x5d0] sm:$0xff]
        %v659 = vld [vmem:[#allocation7 + $0x5d8] sm:$0xff]
        %v660 = vld [vmem:[#allocation7 + $0x5e0] sm:$0xff]
        %v661 = vld [vmem:[#allocation7 + $0x5e8] sm:$0xff]
        %v662 = vld [vmem:[#allocation7 + $0x5f0] sm:$0xff]
        %v663 = vld [vmem:[#allocation7 + $0x5f8] sm:$0xff]
        %v664 = vld [vmem:[#allocation7 + $0x600] sm:$0xff]
        %v665 = vld [vmem:[#allocation7 + $0x608] sm:$0xff]
        %v666 = vld [vmem:[#allocation7 + $0x610] sm:$0xff]
        %v667 = vld [vmem:[#allocation7 + $0x618] sm:$0xff]
        %v668 = vld [vmem:[#allocation7 + $0x620] sm:$0xff]
        %v669 = vld [vmem:[#allocation7 + $0x628] sm:$0xff]
        %v670 = vld [vmem:[#allocation7 + $0x630] sm:$0xff]
        %v671 = vld [vmem:[#allocation7 + $0x638] sm:$0xff]
        %v672 = vld [vmem:[#allocation7 + $0x640] sm:$0xff]
        %v673 = vld [vmem:[#allocation7 + $0x648] sm:$0xff]
        %v674 = vld [vmem:[#allocation7 + $0x650] sm:$0xff]
        %v675 = vld [vmem:[#allocation7 + $0x658] sm:$0xff]
        %v676 = vld [vmem:[#allocation7 + $0x660] sm:$0xff]
        %v677 = vld [vmem:[#allocation7 + $0x668] sm:$0xff]
        %v678 = vld [vmem:[#allocation7 + $0x670] sm:$0xff]
        %v679 = vld [vmem:[#allocation7 + $0x678] sm:$0xff]
        %v680 = vld [vmem:[#allocation7 + $0x680] sm:$0xff]
        %v681 = vld [vmem:[#allocation7 + $0x688] sm:$0xff]
        %v682 = vld [vmem:[#allocation7 + $0x690] sm:$0xff]
        %v683 = vld [vmem:[#allocation7 + $0x698] sm:$0xff]
        %v684 = vld [vmem:[#allocation7 + $0x6a0] sm:$0xff]
        %v685 = vld [vmem:[#allocation7 + $0x6a8] sm:$0xff]
        %v686 = vld [vmem:[#allocation7 + $0x6b0] sm:$0xff]
        %v687 = vld [vmem:[#allocation7 + $0x6b8] sm:$0xff]
        %v688 = vld [vmem:[#allocation7 + $0x6c0] sm:$0xff]
        %v689 = vld [vmem:[#allocation7 + $0x6c8] sm:$0xff]
        %v690 = vld [vmem:[#allocation7 + $0x6d0] sm:$0xff]
        %v691 = vld [vmem:[#allocation7 + $0x6d8] sm:$0xff]
        %v692 = vld [vmem:[#allocation7 + $0x6e0] sm:$0xff]
        %v693 = vld [vmem:[#allocation7 + $0x6e8] sm:$0xff]
        %v694 = vld [vmem:[#allocation7 + $0x6f0] sm:$0xff]
        %v695 = vld [vmem:[#allocation7 + $0x6f8] sm:$0xff]
        %v696 = vld [vmem:[#allocation7 + $0x700] sm:$0xff]
        %v697 = vld [vmem:[#allocation7 + $0x708] sm:$0xff]
        %v698 = vld [vmem:[#allocation7 + $0x710] sm:$0xff]
        %v699 = vld [vmem:[#allocation7 + $0x718] sm:$0xff]
        %v700 = vld [vmem:[#allocation7 + $0x720] sm:$0xff]
        %v701 = vld [vmem:[#allocation7 + $0x728] sm:$0xff]
        %v702 = vld [vmem:[#allocation7 + $0x730] sm:$0xff]
        %v703 = vld [vmem:[#allocation7 + $0x738] sm:$0xff]
        %v704 = vld [vmem:[#allocation7 + $0x740] sm:$0xff]
        %v705 = vld [vmem:[#allocation7 + $0x748] sm:$0xff]
        %v706 = vld [vmem:[#allocation7 + $0x750] sm:$0xff]
        %v707 = vld [vmem:[#allocation7 + $0x758] sm:$0xff]
        %v708 = vld [vmem:[#allocation7 + $0x760] sm:$0xff]
        %v709 = vld [vmem:[#allocation7 + $0x768] sm:$0xff]
        %v710 = vld [vmem:[#allocation7 + $0x770] sm:$0xff]
        %v711 = vld [vmem:[#allocation7 + $0x778] sm:$0xff]
        %v712 = vld [vmem:[#allocation7 + $0x780] sm:$0xff]
        %v713 = vld [vmem:[#allocation7 + $0x788] sm:$0xff]
        %v714 = vld [vmem:[#allocation7 + $0x790] sm:$0xff]
        %v715 = vld [vmem:[#allocation7 + $0x798] sm:$0xff]
        %v716 = vld [vmem:[#allocation7 + $0x7a0] sm:$0xff]
        %v717 = vld [vmem:[#allocation7 + $0x7a8] sm:$0xff]
        %v718 = vld [vmem:[#allocation7 + $0x7b0] sm:$0xff]
        %v719 = vld [vmem:[#allocation7 + $0x7b8] sm:$0xff]
        %v720 = vld [vmem:[#allocation7 + $0x7c0] sm:$0xff]
        %v721 = vld [vmem:[#allocation7 + $0x7c8] sm:$0xff]
        %v722 = vld [vmem:[#allocation7 + $0x7d0] sm:$0xff]
        %v723 = vld [vmem:[#allocation7 + $0x7d8] sm:$0xff]
        %v724 = vld [vmem:[#allocation7 + $0x7e0] sm:$0xff]
        %v725 = vld [vmem:[#allocation7 + $0x7e8] sm:$0xff]
        %v726 = vld [vmem:[#allocation7 + $0x7f0] sm:$0xff]
        %v727 = vld [vmem:[#allocation7 + $0x7f8] sm:$0xff]
        %v728 = vld [vmem:[#allocation8] sm:$0xff]
        %v729 = vld [vmem:[#allocation8 + $0x8] sm:$0xff]
        %v730 = vld [vmem:[#allocation8 + $0x10] sm:$0xff]
        %v731 = vld [vmem:[#allocation8 + $0x18] sm:$0xff]
        %v732 = vld [vmem:[#allocation8 + $0x20] sm:$0xff]
        %v733 = vld [vmem:[#allocation8 + $0x28] sm:$0xff]
        %v734 = vld [vmem:[#allocation8 + $0x30] sm:$0xff]
        %v735 = vld [vmem:[#allocation8 + $0x38] sm:$0xff]
        %v736 = vld [vmem:[#allocation8 + $0x40] sm:$0xff]
        %v737 = vld [vmem:[#allocation8 + $0x48] sm:$0xff]
        %v738 = vld [vmem:[#allocation8 + $0x50] sm:$0xff]
        %v739 = vld [vmem:[#allocation8 + $0x58] sm:$0xff]
        %v740 = vld [vmem:[#allocation8 + $0x60] sm:$0xff]
        %v741 = vld [vmem:[#allocation8 + $0x68] sm:$0xff]
        %v742 = vld [vmem:[#allocation8 + $0x70] sm:$0xff]
        %v743 = vld [vmem:[#allocation8 + $0x78] sm:$0xff]
        %v744 = vld [vmem:[#allocation8 + $0x80] sm:$0xff]
        %v745 = vld [vmem:[#allocation8 + $0x88] sm:$0xff]
        %v746 = vld [vmem:[#allocation8 + $0x90] sm:$0xff]
        %v747 = vld [vmem:[#allocation8 + $0x98] sm:$0xff]
        %v748 = vld [vmem:[#allocation8 + $0xa0] sm:$0xff]
        %v749 = vld [vmem:[#allocation8 + $0xa8] sm:$0xff]
        %v750 = vld [vmem:[#allocation8 + $0xb0] sm:$0xff]
        %v751 = vld [vmem:[#allocation8 + $0xb8] sm:$0xff]
        %v752 = vld [vmem:[#allocation8 + $0xc0] sm:$0xff]
        %v753 = vld [vmem:[#allocation8 + $0xc8] sm:$0xff]
        %v754 = vld [vmem:[#allocation8 + $0xd0] sm:$0xff]
        %v755 = vld [vmem:[#allocation8 + $0xd8] sm:$0xff]
        %v756 = vld [vmem:[#allocation8 + $0xe0] sm:$0xff]
        %v757 = vld [vmem:[#allocation8 + $0xe8] sm:$0xff]
        %v758 = vld [vmem:[#allocation8 + $0xf0] sm:$0xff]
        %v759 = vld [vmem:[#allocation8 + $0xf8] sm:$0xff]
        %v760 = vld [vmem:[#allocation8 + $0x100] sm:$0xff]
        %v761 = vld [vmem:[#allocation8 + $0x108] sm:$0xff]
        %v762 = vld [vmem:[#allocation8 + $0x110] sm:$0xff]
        %v763 = vld [vmem:[#allocation8 + $0x118] sm:$0xff]
        %v764 = vld [vmem:[#allocation8 + $0x120] sm:$0xff]
        %v765 = vld [vmem:[#allocation8 + $0x128] sm:$0xff]
        %v766 = vld [vmem:[#allocation8 + $0x130] sm:$0xff]
        %v767 = vld [vmem:[#allocation8 + $0x138] sm:$0xff]
        %v768 = vld [vmem:[#allocation8 + $0x140] sm:$0xff]
        %v769 = vld [vmem:[#allocation8 + $0x148] sm:$0xff]
        %v770 = vld [vmem:[#allocation8 + $0x150] sm:$0xff]
        %v771 = vld [vmem:[#allocation8 + $0x158] sm:$0xff]
        %v772 = vld [vmem:[#allocation8 + $0x160] sm:$0xff]
        %v773 = vld [vmem:[#allocation8 + $0x168] sm:$0xff]
        %v774 = vld [vmem:[#allocation8 + $0x170] sm:$0xff]
        %v775 = vld [vmem:[#allocation8 + $0x178] sm:$0xff]
        %v776 = vld [vmem:[#allocation8 + $0x180] sm:$0xff]
        %v777 = vld [vmem:[#allocation8 + $0x188] sm:$0xff]
        %v778 = vld [vmem:[#allocation8 + $0x190] sm:$0xff]
        %v779 = vld [vmem:[#allocation8 + $0x198] sm:$0xff]
        %v780 = vld [vmem:[#allocation8 + $0x1a0] sm:$0xff]
        %v781 = vld [vmem:[#allocation8 + $0x1a8] sm:$0xff]
        %v782 = vld [vmem:[#allocation8 + $0x1b0] sm:$0xff]
        %v783 = vld [vmem:[#allocation8 + $0x1b8] sm:$0xff]
        %v784 = vld [vmem:[#allocation8 + $0x1c0] sm:$0xff]
        %v785 = vld [vmem:[#allocation8 + $0x1c8] sm:$0xff]
        %v786 = vld [vmem:[#allocation8 + $0x1d0] sm:$0xff]
        %v787 = vld [vmem:[#allocation8 + $0x1d8] sm:$0xff]
        %v788 = vld [vmem:[#allocation8 + $0x1e0] sm:$0xff]
        %v789 = vld [vmem:[#allocation8 + $0x1e8] sm:$0xff]
        %v790 = vld [vmem:[#allocation8 + $0x1f0] sm:$0xff]
        %v791 = vld [vmem:[#allocation8 + $0x1f8] sm:$0xff]
        %v792 = vld [vmem:[%s2] sm:$0xf]
        %v794 = vlaneseq
        %v795 = vshrl.u32 %v794, 7
        %v796 = vsub.s32 0, %v795
        %v797 = vrot.slane %v792, %v796
        %v798 = vlaneseq
        %v799 = vshrl.u32 %v798, 7
        %v800 = vsub.s32 1, %v799
        %v801 = vrot.slane %v792, %v800
        %v802 = vlaneseq
        %v803 = vshrl.u32 %v802, 7
        %v804 = vsub.s32 2, %v803
        %v805 = vrot.slane %v792, %v804
        %v806 = vlaneseq
        %v807 = vshrl.u32 %v806, 7
        %v808 = vsub.s32 3, %v807
        %v809 = vrot.slane %v792, %v808
        %v814 = vld [vmem:[%s4] sm:$0xf]
        %v816 = vlaneseq
        %v817 = vshrl.u32 %v816, 7
        %v818 = vsub.s32 0, %v817
        %v819 = vrot.slane %v814, %v818
        %v820 = vlaneseq
        %v821 = vshrl.u32 %v820, 7
        %v822 = vsub.s32 1, %v821
        %v823 = vrot.slane %v814, %v822
        %v824 = vlaneseq
        %v825 = vshrl.u32 %v824, 7
        %v826 = vsub.s32 2, %v825
        %v827 = vrot.slane %v814, %v826
        %v828 = vlaneseq
        %v829 = vshrl.u32 %v828, 7
        %v830 = vsub.s32 3, %v829
        %v831 = vrot.slane %v814, %v830
        %v836 = vld [vmem:[%s6] sm:$0x1]
        %v838 = vlaneseq
        %v839 = vshrl.u32 %v838, 7
        %v840 = vsub.s32 0, %v839
        %v841 = vrot.slane %v836, %v840
        %v843 = vld [vmem:[%s299] sm:$0xff]
        %v844 = vld [vmem:[%s299 + $0x8] sm:$0xff]
        %v845 = vld [vmem:[%s299 + $0x10] sm:$0xff]
        %v846 = vld [vmem:[%s299 + $0x18] sm:$0xff]
        %847 = vmatprep.subr.mxu0 %v345
        %848 = vmatpush1.msra.mxu0 %v344
        %849 = vmatprep.subr.mxu0 %v349
        %850 = vmatpush1.msra.mxu0 %v348
        %851 = vmatprep.subr.mxu0 %v353
        %852 = vmatpush1.msra.mxu0 %v352
        %853 = vmatprep.subr.mxu0 %v357
        %854 = vmatpush1.msra.mxu0 %v356
        %855 = vmatprep.subr.mxu0 %v361
        %856 = vmatpush1.msra.mxu0 %v360
        %857 = vmatprep.subr.mxu0 %v365
        %858 = vmatpush1.msra.mxu0 %v364
        %859 = vmatprep.subr.mxu0 %v369
        %860 = vmatpush1.msra.mxu0 %v368
        %861 = vmatprep.subr.mxu0 %v373
        %862 = vmatpush1.msra.mxu0 %v372
        %863 = vmatprep.subr.mxu0 %v377
        %864 = vmatpush1.msra.mxu0 %v376
        %865 = vmatprep.subr.mxu0 %v381
        %866 = vmatpush1.msra.mxu0 %v380
        %867 = vmatprep.subr.mxu0 %v385
        %868 = vmatpush1.msra.mxu0 %v384
        %869 = vmatprep.subr.mxu0 %v389
        %870 = vmatpush1.msra.mxu0 %v388
        %871 = vmatprep.subr.mxu0 %v393
        %872 = vmatpush1.msra.mxu0 %v392
        %873 = vmatprep.subr.mxu0 %v397
        %874 = vmatpush1.msra.mxu0 %v396
        %875 = vmatprep.subr.mxu0 %v401
        %876 = vmatpush1.msra.mxu0 %v400
        %877 = vmatprep.subr.mxu0 %v405
        %878 = vmatpush1.msra.mxu0 %v404
        %879 = vmatprep.subr.mxu0 %v409
        %880 = vmatpush1.msra.mxu0 %v408
        %881 = vmatprep.subr.mxu0 %v413
        %882 = vmatpush1.msra.mxu0 %v412
        %883 = vmatprep.subr.mxu0 %v417
        %884 = vmatpush1.msra.mxu0 %v416
        %885 = vmatprep.subr.mxu0 %v421
        %886 = vmatpush1.msra.mxu0 %v420
        %887 = vmatprep.subr.mxu0 %v425
        %888 = vmatpush1.msra.mxu0 %v424
        %889 = vmatprep.subr.mxu0 %v429
        %890 = vmatpush1.msra.mxu0 %v428
        %891 = vmatprep.subr.mxu0 %v433
        %892 = vmatpush1.msra.mxu0 %v432
        %893 = vmatprep.subr.mxu0 %v437
        %894 = vmatpush1.msra.mxu0 %v436
        %895 = vmatprep.subr.mxu0 %v441
        %896 = vmatpush1.msra.mxu0 %v440
        %897 = vmatprep.subr.mxu0 %v445
        %898 = vmatpush1.msra.mxu0 %v444
        %899 = vmatprep.subr.mxu0 %v449
        %900 = vmatpush1.msra.mxu0 %v448
        %901 = vmatprep.subr.mxu0 %v453
        %902 = vmatpush1.msra.mxu0 %v452
        %903 = vmatprep.subr.mxu0 %v457
        %904 = vmatpush1.msra.mxu0 %v456
        %905 = vmatprep.subr.mxu0 %v461
        %906 = vmatpush1.msra.mxu0 %v460
        %907 = vmatprep.subr.mxu0 %v465
        %908 = vmatpush1.msra.mxu0 %v464
        %909 = vmatprep.subr.mxu0 %v469
        %910 = vmatpush1.msra.mxu0 %v468
        %911 = vmatprep.mubr.f32.mxu0 %v844
        %912 = vmatmul.mubr.f32.gmra.mrb[0].mxu0 %v843
        %v913 = vpop.f32.mrb[0].mxu0
        %v914 = vadd.f32 %v797, %v913
        %v915 = vpop.f32.mrb[0].mxu0
        %v916 = vadd.f32 %v801, %v915
        %917 = vmatprep.mubr.f32.mxu0 %v846
        %918 = vmatmul.mubr.f32.gmra.mrb[0].mxu0 %v845
        %v919 = vpop.f32.mrb[0].mxu0
        %v920 = vadd.f32 %v797, %v919
        %v921 = vpop.f32.mrb[0].mxu0
        %v922 = vadd.f32 %v801, %v921
        %923 = vdwg.mxu0
        %924 = vmatprep.subr.mxu0 %v347
        %925 = vmatpush1.msra.mxu0 %v346
        %926 = vmatprep.subr.mxu0 %v351
        %927 = vmatpush1.msra.mxu0 %v350
        %928 = vmatprep.subr.mxu0 %v355
        %929 = vmatpush1.msra.mxu0 %v354
        %930 = vmatprep.subr.mxu0 %v359
        %931 = vmatpush1.msra.mxu0 %v358
        %932 = vmatprep.subr.mxu0 %v363
        %933 = vmatpush1.msra.mxu0 %v362
        %934 = vmatprep.subr.mxu0 %v367
        %935 = vmatpush1.msra.mxu0 %v366
        %936 = vmatprep.subr.mxu0 %v371
        %937 = vmatpush1.msra.mxu0 %v370
        %938 = vmatprep.subr.mxu0 %v375
        %939 = vmatpush1.msra.mxu0 %v374
        %940 = vmatprep.subr.mxu0 %v379
        %941 = vmatpush1.msra.mxu0 %v378
        %942 = vmatprep.subr.mxu0 %v383
        %943 = vmatpush1.msra.mxu0 %v382
        %944 = vmatprep.subr.mxu0 %v387
        %945 = vmatpush1.msra.mxu0 %v386
        %946 = vmatprep.subr.mxu0 %v391
        %947 = vmatpush1.msra.mxu0 %v390
        %948 = vmatprep.subr.mxu0 %v395
        %949 = vmatpush1.msra.mxu0 %v394
        %950 = vmatprep.subr.mxu0 %v399
        %951 = vmatpush1.msra.mxu0 %v398
        %952 = vmatprep.subr.mxu0 %v403
        %953 = vmatpush1.msra.mxu0 %v402
        %954 = vmatprep.subr.mxu0 %v407
        %955 = vmatpush1.msra.mxu0 %v406
        %956 = vmatprep.subr.mxu0 %v411
        %957 = vmatpush1.msra.mxu0 %v410
        %958 = vmatprep.subr.mxu0 %v415
        %959 = vmatpush1.msra.mxu0 %v414
        %960 = vmatprep.subr.mxu0 %v419
        %961 = vmatpush1.msra.mxu0 %v418
        %962 = vmatprep.subr.mxu0 %v423
        %963 = vmatpush1.msra.mxu0 %v422
        %964 = vmatprep.subr.mxu0 %v427
        %965 = vmatpush1.msra.mxu0 %v426
        %966 = vmatprep.subr.mxu0 %v431
        %967 = vmatpush1.msra.mxu0 %v430
        %968 = vmatprep.subr.mxu0 %v435
        %969 = vmatpush1.msra.mxu0 %v434
        %970 = vmatprep.subr.mxu0 %v439
        %971 = vmatpush1.msra.mxu0 %v438
        %972 = vmatprep.subr.mxu0 %v443
        %973 = vmatpush1.msra.mxu0 %v442
        %974 = vmatprep.subr.mxu0 %v447
        %975 = vmatpush1.msra.mxu0 %v446
        %976 = vmatprep.subr.mxu0 %v451
        %977 = vmatpush1.msra.mxu0 %v450
        %978 = vmatprep.subr.mxu0 %v455
        %979 = vmatpush1.msra.mxu0 %v454
        %980 = vmatprep.subr.mxu0 %v459
        %981 = vmatpush1.msra.mxu0 %v458
        %982 = vmatprep.subr.mxu0 %v463
        %983 = vmatpush1.msra.mxu0 %v462
        %984 = vmatprep.subr.mxu0 %v467
        %985 = vmatpush1.msra.mxu0 %v466
        %986 = vmatprep.subr.mxu0 %v471
        %987 = vmatpush1.msra.mxu0 %v470
        %988 = vmatprep.mubr.f32.mxu0 %v844
        %989 = vmatmul.mubr.f32.gmra.mrb[0].mxu0 %v843
        %v990 = vpop.f32.mrb[0].mxu0
        %v991 = vadd.f32 %v805, %v990
        %v992 = vpop.f32.mrb[0].mxu0
        %v993 = vadd.f32 %v809, %v992
        %994 = vmatprep.mubr.f32.mxu0 %v846
        %995 = vmatmul.mubr.f32.gmra.mrb[0].mxu0 %v845
        %v996 = vpop.f32.mrb[0].mxu0
        %v997 = vadd.f32 %v805, %v996
        %v998 = vpop.f32.mrb[0].mxu0
        %v999 = vadd.f32 %v809, %v998
        %1000 = vdwg.mxu0
        %v1001 = vmin.f32 %v914, 20.0
        %v1002 = vmin.f32 %v916, 20.0
        %v1003 = vmin.f32 %v991, 20.0
        %v1004 = vmin.f32 %v993, 20.0
        %v1005 = vmin.f32 %v920, 20.0
        %v1006 = vmin.f32 %v922, 20.0
        %v1007 = vmin.f32 %v997, 20.0
        %v1008 = vmin.f32 %v999, 20.0
        %v1009 = vmul.f32 %v1001, 1.442695
        %v1010 = vpow.pop %v1009
        %v1011 = vmul.f32 %v1002, 1.442695
        %v1012 = vpow.pop %v1011
        %v1013 = vmul.f32 %v1003, 1.442695
        %v1014 = vpow.pop %v1013
        %v1015 = vmul.f32 %v1004, 1.442695
        %v1016 = vpow.pop %v1015
        %v1017 = vmul.f32 %v1005, 1.442695
        %v1018 = vpow.pop %v1017
        %v1019 = vmul.f32 %v1006, 1.442695
        %v1020 = vpow.pop %v1019
        %v1021 = vmul.f32 %v1007, 1.442695
        %v1022 = vpow.pop %v1021
        %v1023 = vmul.f32 %v1008, 1.442695
        %v1024 = vpow.pop %v1023
        %v1025 = vadd.f32 %v1010, 2.0
        %v1026 = vadd.f32 %v1012, 2.0
        %v1027 = vadd.f32 %v1014, 2.0
        %v1028 = vadd.f32 %v1016, 2.0
        %v1029 = vadd.f32 %v1018, 2.0
        %v1030 = vadd.f32 %v1020, 2.0
        %v1031 = vadd.f32 %v1022, 2.0
        %v1032 = vadd.f32 %v1024, 2.0
        %v1033 = vmul.f32 %v1010, %v1025
        %v1034 = vmul.f32 %v1012, %v1026
        %v1035 = vmul.f32 %v1014, %v1027
        %v1036 = vmul.f32 %v1016, %v1028
        %v1037 = vmul.f32 %v1018, %v1029
        %v1038 = vmul.f32 %v1020, %v1030
        %v1039 = vmul.f32 %v1022, %v1031
        %v1040 = vmul.f32 %v1024, %v1032
        %v1041 = vadd.f32 %v1033, 2.0
        %v1042 = vadd.f32 %v1034, 2.0
        %v1043 = vadd.f32 %v1035, 2.0
        %v1044 = vadd.f32 %v1036, 2.0
        %v1045 = vadd.f32 %v1037, 2.0
        %v1046 = vadd.f32 %v1038, 2.0
        %v1047 = vadd.f32 %v1039, 2.0
        %v1048 = vadd.f32 %v1040, 2.0
        %v1049 = vrcp.pop %v1041
        %v1050 = vrcp.pop %v1042
        %v1051 = vrcp.pop %v1043
        %v1052 = vrcp.pop %v1044
        %v1053 = vrcp.pop %v1045
        %v1054 = vrcp.pop %v1046
        %v1055 = vrcp.pop %v1047
        %v1056 = vrcp.pop %v1048
        %v1057 = vmul.f32 %v1041, %v1049
        %v1058 = vmul.f32 %v1042, %v1050
        %v1059 = vmul.f32 %v1043, %v1051
        %v1060 = vmul.f32 %v1044, %v1052
        %v1061 = vmul.f32 %v1045, %v1053
        %v1062 = vmul.f32 %v1046, %v1054
        %v1063 = vmul.f32 %v1047, %v1055
        %v1064 = vmul.f32 %v1048, %v1056
        %v1065 = vsub.f32 2.0, %v1057
        %v1066 = vsub.f32 2.0, %v1058
        %v1067 = vsub.f32 2.0, %v1059
        %v1068 = vsub.f32 2.0, %v1060
        %v1069 = vsub.f32 2.0, %v1061
        %v1070 = vsub.f32 2.0, %v1062
        %v1071 = vsub.f32 2.0, %v1063
        %v1072 = vsub.f32 2.0, %v1064
        %v1073 = vmul.f32 %v1049, %v1065
        %v1074 = vmul.f32 %v1050, %v1066
        %v1075 = vmul.f32 %v1051, %v1067
        %v1076 = vmul.f32 %v1052, %v1068
        %v1077 = vmul.f32 %v1053, %v1069
        %v1078 = vmul.f32 %v1054, %v1070
        %v1079 = vmul.f32 %v1055, %v1071
        %v1080 = vmul.f32 %v1056, %v1072
        %v1081 = vmul.f32 %v1033, %v1073
        %v1082 = vmul.f32 %v1034, %v1074
        %v1083 = vmul.f32 %v1035, %v1075
        %v1084 = vmul.f32 %v1036, %v1076
        %v1085 = vmul.f32 %v1037, %v1077
        %v1086 = vmul.f32 %v1038, %v1078
        %v1087 = vmul.f32 %v1039, %v1079
        %v1088 = vmul.f32 %v1040, %v1080
        %v1089 = vmul.f32 %v914, %v1081
        %v1090 = vmul.f32 %v916, %v1082
        %v1091 = vmul.f32 %v991, %v1083
        %v1092 = vmul.f32 %v993, %v1084
        %v1093 = vmul.f32 %v920, %v1085
        %v1094 = vmul.f32 %v922, %v1086
        %v1095 = vmul.f32 %v997, %v1087
        %v1096 = vmul.f32 %v999, %v1088
        %1097 = vmatprep.subr.mxu0 %v473
        %1098 = vmatpush1.msra.mxu0 %v472
        %1099 = vmatprep.subr.mxu0 %v477
        %1100 = vmatpush1.msra.mxu0 %v476
        %1101 = vmatprep.subr.mxu0 %v481
        %1102 = vmatpush1.msra.mxu0 %v480
        %1103 = vmatprep.subr.mxu0 %v485
        %1104 = vmatpush1.msra.mxu0 %v484
        %1105 = vmatprep.subr.mxu0 %v489
        %1106 = vmatpush1.msra.mxu0 %v488
        %1107 = vmatprep.subr.mxu0 %v493
        %1108 = vmatpush1.msra.mxu0 %v492
        %1109 = vmatprep.subr.mxu0 %v497
        %1110 = vmatpush1.msra.mxu0 %v496
        %1111 = vmatprep.subr.mxu0 %v501
        %1112 = vmatpush1.msra.mxu0 %v500
        %1113 = vmatprep.subr.mxu0 %v505
        %1114 = vmatpush1.msra.mxu0 %v504
        %1115 = vmatprep.subr.mxu0 %v509
        %1116 = vmatpush1.msra.mxu0 %v508
        %1117 = vmatprep.subr.mxu0 %v513
        %1118 = vmatpush1.msra.mxu0 %v512
        %1119 = vmatprep.subr.mxu0 %v517
        %1120 = vmatpush1.msra.mxu0 %v516
        %1121 = vmatprep.subr.mxu0 %v521
        %1122 = vmatpush1.msra.mxu0 %v520
        %1123 = vmatprep.subr.mxu0 %v525
        %1124 = vmatpush1.msra.mxu0 %v524
        %1125 = vmatprep.subr.mxu0 %v529
        %1126 = vmatpush1.msra.mxu0 %v528
        %1127 = vmatprep.subr.mxu0 %v533
        %1128 = vmatpush1.msra.mxu0 %v532
        %1129 = vmatprep.subr.mxu0 %v537
        %1130 = vmatpush1.msra.mxu0 %v536
        %1131 = vmatprep.subr.mxu0 %v541
        %1132 = vmatpush1.msra.mxu0 %v540
        %1133 = vmatprep.subr.mxu0 %v545
        %1134 = vmatpush1.msra.mxu0 %v544
        %1135 = vmatprep.subr.mxu0 %v549
        %1136 = vmatpush1.msra.mxu0 %v548
        %1137 = vmatprep.subr.mxu0 %v553
        %1138 = vmatpush1.msra.mxu0 %v552
        %1139 = vmatprep.subr.mxu0 %v557
        %1140 = vmatpush1.msra.mxu0 %v556
        %1141 = vmatprep.subr.mxu0 %v561
        %1142 = vmatpush1.msra.mxu0 %v560
        %1143 = vmatprep.subr.mxu0 %v565
        %1144 = vmatpush1.msra.mxu0 %v564
        %1145 = vmatprep.subr.mxu0 %v569
        %1146 = vmatpush1.msra.mxu0 %v568
        %1147 = vmatprep.subr.mxu0 %v573
        %1148 = vmatpush1.msra.mxu0 %v572
        %1149 = vmatprep.subr.mxu0 %v577
        %1150 = vmatpush1.msra.mxu0 %v576
        %1151 = vmatprep.subr.mxu0 %v581
        %1152 = vmatpush1.msra.mxu0 %v580
        %1153 = vmatprep.subr.mxu0 %v585
        %1154 = vmatpush1.msra.mxu0 %v584
        %1155 = vmatprep.subr.mxu0 %v589
        %1156 = vmatpush1.msra.mxu0 %v588
        %1157 = vmatprep.subr.mxu0 %v593
        %1158 = vmatpush1.msra.mxu0 %v592
        %1159 = vmatprep.subr.mxu0 %v597
        %1160 = vmatpush1.msra.mxu0 %v596
        %1161 = vmatprep.mubr.f32.mxu0 %v1090
        %1162 = vmatmul.mubr.f32.gmra.mrb[0].mxu0 %v1089
        %v1163 = vpop.f32.mrb[0].mxu0
        %v1164 = vadd.f32 %v819, %v1163
        %v1165 = vpop.f32.mrb[0].mxu0
        %v1166 = vadd.f32 %v823, %v1165
        %1167 = vmatprep.mubr.f32.mxu0 %v1094
        %1168 = vmatmul.mubr.f32.gmra.mrb[0].mxu0 %v1093
        %v1169 = vpop.f32.mrb[0].mxu0
        %v1170 = vadd.f32 %v819, %v1169
        %v1171 = vpop.f32.mrb[0].mxu0
        %v1172 = vadd.f32 %v823, %v1171
        %1173 = vdwg.mxu0
        %1174 = vmatprep.subr.mxu0 %v601
        %1175 = vmatpush1.msra.mxu0 %v600
        %1176 = vmatprep.subr.mxu0 %v605
        %1177 = vmatpush1.msra.mxu0 %v604
        %1178 = vmatprep.subr.mxu0 %v609
        %1179 = vmatpush1.msra.mxu0 %v608
        %1180 = vmatprep.subr.mxu0 %v613
        %1181 = vmatpush1.msra.mxu0 %v612
        %1182 = vmatprep.subr.mxu0 %v617
        %1183 = vmatpush1.msra.mxu0 %v616
        %1184 = vmatprep.subr.mxu0 %v621
        %1185 = vmatpush1.msra.mxu0 %v620
        %1186 = vmatprep.subr.mxu0 %v625
        %1187 = vmatpush1.msra.mxu0 %v624
        %1188 = vmatprep.subr.mxu0 %v629
        %1189 = vmatpush1.msra.mxu0 %v628
        %1190 = vmatprep.subr.mxu0 %v633
        %1191 = vmatpush1.msra.mxu0 %v632
        %1192 = vmatprep.subr.mxu0 %v637
        %1193 = vmatpush1.msra.mxu0 %v636
        %1194 = vmatprep.subr.mxu0 %v641
        %1195 = vmatpush1.msra.mxu0 %v640
        %1196 = vmatprep.subr.mxu0 %v645
        %1197 = vmatpush1.msra.mxu0 %v644
        %1198 = vmatprep.subr.mxu0 %v649
        %1199 = vmatpush1.msra.mxu0 %v648
        %1200 = vmatprep.subr.mxu0 %v653
        %1201 = vmatpush1.msra.mxu0 %v652
        %1202 = vmatprep.subr.mxu0 %v657
        %1203 = vmatpush1.msra.mxu0 %v656
        %1204 = vmatprep.subr.mxu0 %v661
        %1205 = vmatpush1.msra.mxu0 %v660
        %1206 = vmatprep.subr.mxu0 %v665
        %1207 = vmatpush1.msra.mxu0 %v664
        %1208 = vmatprep.subr.mxu0 %v669
        %1209 = vmatpush1.msra.mxu0 %v668
        %1210 = vmatprep.subr.mxu0 %v673
        %1211 = vmatpush1.msra.mxu0 %v672
        %1212 = vmatprep.subr.mxu0 %v677
        %1213 = vmatpush1.msra.mxu0 %v676
        %1214 = vmatprep.subr.mxu0 %v681
        %1215 = vmatpush1.msra.mxu0 %v680
        %1216 = vmatprep.subr.mxu0 %v685
        %1217 = vmatpush1.msra.mxu0 %v684
        %1218 = vmatprep.subr.mxu0 %v689
        %1219 = vmatpush1.msra.mxu0 %v688
        %1220 = vmatprep.subr.mxu0 %v693
        %1221 = vmatpush1.msra.mxu0 %v692
        %1222 = vmatprep.subr.mxu0 %v697
        %1223 = vmatpush1.msra.mxu0 %v696
        %1224 = vmatprep.subr.mxu0 %v701
        %1225 = vmatpush1.msra.mxu0 %v700
        %1226 = vmatprep.subr.mxu0 %v705
        %1227 = vmatpush1.msra.mxu0 %v704
        %1228 = vmatprep.subr.mxu0 %v709
        %1229 = vmatpush1.msra.mxu0 %v708
        %1230 = vmatprep.subr.mxu0 %v713
        %1231 = vmatpush1.msra.mxu0 %v712
        %1232 = vmatprep.subr.mxu0 %v717
        %1233 = vmatpush1.msra.mxu0 %v716
        %1234 = vmatprep.subr.mxu0 %v721
        %1235 = vmatpush1.msra.mxu0 %v720
        %1236 = vmatprep.subr.mxu0 %v725
        %1237 = vmatpush1.msra.mxu0 %v724
        %1238 = vmatprep.mubr.f32.mxu0 %v1092
        %1239 = vmatmul.mubr.f32.gmra.mrb[0].mxu0 %v1091
        %v1240 = vpop.f32.mrb[0].mxu0
        %v1241 = vadd.f32 %v1164, %v1240
        %v1242 = vpop.f32.mrb[0].mxu0
        %v1243 = vadd.f32 %v1166, %v1242
        %1244 = vmatprep.mubr.f32.mxu0 %v1096
        %1245 = vmatmul.mubr.f32.gmra.mrb[0].mxu0 %v1095
        %v1246 = vpop.f32.mrb[0].mxu0
        %v1247 = vadd.f32 %v1170, %v1246
        %v1248 = vpop.f32.mrb[0].mxu0
        %v1249 = vadd.f32 %v1172, %v1248
        %1250 = vdwg.mxu0
        %1251 = vmatprep.subr.mxu0 %v475
        %1252 = vmatpush1.msra.mxu0 %v474
        %1253 = vmatprep.subr.mxu0 %v479
        %1254 = vmatpush1.msra.mxu0 %v478
        %1255 = vmatprep.subr.mxu0 %v483
        %1256 = vmatpush1.msra.mxu0 %v482
        %1257 = vmatprep.subr.mxu0 %v487
        %1258 = vmatpush1.msra.mxu0 %v486
        %1259 = vmatprep.subr.mxu0 %v491
        %1260 = vmatpush1.msra.mxu0 %v490
        %1261 = vmatprep.subr.mxu0 %v495
        %1262 = vmatpush1.msra.mxu0 %v494
        %1263 = vmatprep.subr.mxu0 %v499
        %1264 = vmatpush1.msra.mxu0 %v498
        %1265 = vmatprep.subr.mxu0 %v503
        %1266 = vmatpush1.msra.mxu0 %v502
        %1267 = vmatprep.subr.mxu0 %v507
        %1268 = vmatpush1.msra.mxu0 %v506
        %1269 = vmatprep.subr.mxu0 %v511
        %1270 = vmatpush1.msra.mxu0 %v510
        %1271 = vmatprep.subr.mxu0 %v515
        %1272 = vmatpush1.msra.mxu0 %v514
        %1273 = vmatprep.subr.mxu0 %v519
        %1274 = vmatpush1.msra.mxu0 %v518
        %1275 = vmatprep.subr.mxu0 %v523
        %1276 = vmatpush1.msra.mxu0 %v522
        %1277 = vmatprep.subr.mxu0 %v527
        %1278 = vmatpush1.msra.mxu0 %v526
        %1279 = vmatprep.subr.mxu0 %v531
        %1280 = vmatpush1.msra.mxu0 %v530
        %1281 = vmatprep.subr.mxu0 %v535
        %1282 = vmatpush1.msra.mxu0 %v534
        %1283 = vmatprep.subr.mxu0 %v539
        %1284 = vmatpush1.msra.mxu0 %v538
        %1285 = vmatprep.subr.mxu0 %v543
        %1286 = vmatpush1.msra.mxu0 %v542
        %1287 = vmatprep.subr.mxu0 %v547
        %1288 = vmatpush1.msra.mxu0 %v546
        %1289 = vmatprep.subr.mxu0 %v551
        %1290 = vmatpush1.msra.mxu0 %v550
        %1291 = vmatprep.subr.mxu0 %v555
        %1292 = vmatpush1.msra.mxu0 %v554
        %1293 = vmatprep.subr.mxu0 %v559
        %1294 = vmatpush1.msra.mxu0 %v558
        %1295 = vmatprep.subr.mxu0 %v563
        %1296 = vmatpush1.msra.mxu0 %v562
        %1297 = vmatprep.subr.mxu0 %v567
        %1298 = vmatpush1.msra.mxu0 %v566
        %1299 = vmatprep.subr.mxu0 %v571
        %1300 = vmatpush1.msra.mxu0 %v570
        %1301 = vmatprep.subr.mxu0 %v575
        %1302 = vmatpush1.msra.mxu0 %v574
        %1303 = vmatprep.subr.mxu0 %v579
        %1304 = vmatpush1.msra.mxu0 %v578
        %1305 = vmatprep.subr.mxu0 %v583
        %1306 = vmatpush1.msra.mxu0 %v582
        %1307 = vmatprep.subr.mxu0 %v587
        %1308 = vmatpush1.msra.mxu0 %v586
        %1309 = vmatprep.subr.mxu0 %v591
        %1310 = vmatpush1.msra.mxu0 %v590
        %1311 = vmatprep.subr.mxu0 %v595
        %1312 = vmatpush1.msra.mxu0 %v594
        %1313 = vmatprep.subr.mxu0 %v599
        %1314 = vmatpush1.msra.mxu0 %v598
        %1315 = vmatprep.mubr.f32.mxu0 %v1090
        %1316 = vmatmul.mubr.f32.gmra.mrb[0].mxu0 %v1089
        %v1317 = vpop.f32.mrb[0].mxu0
        %v1318 = vadd.f32 %v827, %v1317
        %v1319 = vpop.f32.mrb[0].mxu0
        %v1320 = vadd.f32 %v831, %v1319
        %1321 = vmatprep.mubr.f32.mxu0 %v1094
        %1322 = vmatmul.mubr.f32.gmra.mrb[0].mxu0 %v1093
        %v1323 = vpop.f32.mrb[0].mxu0
        %v1324 = vadd.f32 %v827, %v1323
        %v1325 = vpop.f32.mrb[0].mxu0
        %v1326 = vadd.f32 %v831, %v1325
        %1327 = vdwg.mxu0
        %1328 = vmatprep.subr.mxu0 %v603
        %1329 = vmatpush1.msra.mxu0 %v602
        %1330 = vmatprep.subr.mxu0 %v607
        %1331 = vmatpush1.msra.mxu0 %v606
        %1332 = vmatprep.subr.mxu0 %v611
        %1333 = vmatpush1.msra.mxu0 %v610
        %1334 = vmatprep.subr.mxu0 %v615
        %1335 = vmatpush1.msra.mxu0 %v614
        %1336 = vmatprep.subr.mxu0 %v619
        %1337 = vmatpush1.msra.mxu0 %v618
        %1338 = vmatprep.subr.mxu0 %v623
        %1339 = vmatpush1.msra.mxu0 %v622
        %1340 = vmatprep.subr.mxu0 %v627
        %1341 = vmatpush1.msra.mxu0 %v626
        %1342 = vmatprep.subr.mxu0 %v631
        %1343 = vmatpush1.msra.mxu0 %v630
        %1344 = vmatprep.subr.mxu0 %v635
        %1345 = vmatpush1.msra.mxu0 %v634
        %1346 = vmatprep.subr.mxu0 %v639
        %1347 = vmatpush1.msra.mxu0 %v638
        %1348 = vmatprep.subr.mxu0 %v643
        %1349 = vmatpush1.msra.mxu0 %v642
        %1350 = vmatprep.subr.mxu0 %v647
        %1351 = vmatpush1.msra.mxu0 %v646
        %1352 = vmatprep.subr.mxu0 %v651
        %1353 = vmatpush1.msra.mxu0 %v650
        %1354 = vmatprep.subr.mxu0 %v655
        %1355 = vmatpush1.msra.mxu0 %v654
        %1356 = vmatprep.subr.mxu0 %v659
        %1357 = vmatpush1.msra.mxu0 %v658
        %1358 = vmatprep.subr.mxu0 %v663
        %1359 = vmatpush1.msra.mxu0 %v662
        %1360 = vmatprep.subr.mxu0 %v667
        %1361 = vmatpush1.msra.mxu0 %v666
        %1362 = vmatprep.subr.mxu0 %v671
        %1363 = vmatpush1.msra.mxu0 %v670
        %1364 = vmatprep.subr.mxu0 %v675
        %1365 = vmatpush1.msra.mxu0 %v674
        %1366 = vmatprep.subr.mxu0 %v679
        %1367 = vmatpush1.msra.mxu0 %v678
        %1368 = vmatprep.subr.mxu0 %v683
        %1369 = vmatpush1.msra.mxu0 %v682
        %1370 = vmatprep.subr.mxu0 %v687
        %1371 = vmatpush1.msra.mxu0 %v686
        %1372 = vmatprep.subr.mxu0 %v691
        %1373 = vmatpush1.msra.mxu0 %v690
        %1374 = vmatprep.subr.mxu0 %v695
        %1375 = vmatpush1.msra.mxu0 %v694
        %1376 = vmatprep.subr.mxu0 %v699
        %1377 = vmatpush1.msra.mxu0 %v698
        %1378 = vmatprep.subr.mxu0 %v703
        %1379 = vmatpush1.msra.mxu0 %v702
        %1380 = vmatprep.subr.mxu0 %v707
        %1381 = vmatpush1.msra.mxu0 %v706
        %1382 = vmatprep.subr.mxu0 %v711
        %1383 = vmatpush1.msra.mxu0 %v710
        %1384 = vmatprep.subr.mxu0 %v715
        %1385 = vmatpush1.msra.mxu0 %v714
        %1386 = vmatprep.subr.mxu0 %v719
        %1387 = vmatpush1.msra.mxu0 %v718
        %1388 = vmatprep.subr.mxu0 %v723
        %1389 = vmatpush1.msra.mxu0 %v722
        %1390 = vmatprep.subr.mxu0 %v727
        %1391 = vmatpush1.msra.mxu0 %v726
        %1392 = vmatprep.mubr.f32.mxu0 %v1092
        %1393 = vmatmul.mubr.f32.gmra.mrb[0].mxu0 %v1091
        %v1394 = vpop.f32.mrb[0].mxu0
        %v1395 = vadd.f32 %v1318, %v1394
        %v1396 = vpop.f32.mrb[0].mxu0
        %v1397 = vadd.f32 %v1320, %v1396
        %1398 = vmatprep.mubr.f32.mxu0 %v1096
        %1399 = vmatmul.mubr.f32.gmra.mrb[0].mxu0 %v1095
        %v1400 = vpop.f32.mrb[0].mxu0
        %v1401 = vadd.f32 %v1324, %v1400
        %v1402 = vpop.f32.mrb[0].mxu0
        %v1403 = vadd.f32 %v1326, %v1402
        %1404 = vdwg.mxu0
        %v1405 = vmin.f32 %v1241, 20.0
        %v1406 = vmin.f32 %v1243, 20.0
        %v1407 = vmin.f32 %v1395, 20.0
        %v1408 = vmin.f32 %v1397, 20.0
        %v1409 = vmin.f32 %v1247, 20.0
        %v1410 = vmin.f32 %v1249, 20.0
        %v1411 = vmin.f32 %v1401, 20.0
        %v1412 = vmin.f32 %v1403, 20.0
        %v1413 = vmul.f32 %v1405, 1.442695
        %v1414 = vpow.pop %v1413
        %v1415 = vmul.f32 %v1406, 1.442695
        %v1416 = vpow.pop %v1415
        %v1417 = vmul.f32 %v1407, 1.442695
        %v1418 = vpow.pop %v1417
        %v1419 = vmul.f32 %v1408, 1.442695
        %v1420 = vpow.pop %v1419
        %v1421 = vmul.f32 %v1409, 1.442695
        %v1422 = vpow.pop %v1421
        %v1423 = vmul.f32 %v1410, 1.442695
        %v1424 = vpow.pop %v1423
        %v1425 = vmul.f32 %v1411, 1.442695
        %v1426 = vpow.pop %v1425
        %v1427 = vmul.f32 %v1412, 1.442695
        %v1428 = vpow.pop %v1427
        %v1429 = vadd.f32 %v1414, 2.0
        %v1430 = vadd.f32 %v1416, 2.0
        %v1431 = vadd.f32 %v1418, 2.0
        %v1432 = vadd.f32 %v1420, 2.0
        %v1433 = vadd.f32 %v1422, 2.0
        %v1434 = vadd.f32 %v1424, 2.0
        %v1435 = vadd.f32 %v1426, 2.0
        %v1436 = vadd.f32 %v1428, 2.0
        %v1437 = vmul.f32 %v1414, %v1429
        %v1438 = vmul.f32 %v1416, %v1430
        %v1439 = vmul.f32 %v1418, %v1431
        %v1440 = vmul.f32 %v1420, %v1432
        %v1441 = vmul.f32 %v1422, %v1433
        %v1442 = vmul.f32 %v1424, %v1434
        %v1443 = vmul.f32 %v1426, %v1435
        %v1444 = vmul.f32 %v1428, %v1436
        %v1445 = vadd.f32 %v1437, 2.0
        %v1446 = vadd.f32 %v1438, 2.0
        %v1447 = vadd.f32 %v1439, 2.0
        %v1448 = vadd.f32 %v1440, 2.0
        %v1449 = vadd.f32 %v1441, 2.0
        %v1450 = vadd.f32 %v1442, 2.0
        %v1451 = vadd.f32 %v1443, 2.0
        %v1452 = vadd.f32 %v1444, 2.0
        %v1453 = vrcp.pop %v1445
        %v1454 = vrcp.pop %v1446
        %v1455 = vrcp.pop %v1447
        %v1456 = vrcp.pop %v1448
        %v1457 = vrcp.pop %v1449
        %v1458 = vrcp.pop %v1450
        %v1459 = vrcp.pop %v1451
        %v1460 = vrcp.pop %v1452
        %v1461 = vmul.f32 %v1445, %v1453
        %v1462 = vmul.f32 %v1446, %v1454
        %v1463 = vmul.f32 %v1447, %v1455
        %v1464 = vmul.f32 %v1448, %v1456
        %v1465 = vmul.f32 %v1449, %v1457
        %v1466 = vmul.f32 %v1450, %v1458
        %v1467 = vmul.f32 %v1451, %v1459
        %v1468 = vmul.f32 %v1452, %v1460
        %v1469 = vsub.f32 2.0, %v1461
        %v1470 = vsub.f32 2.0, %v1462
        %v1471 = vsub.f32 2.0, %v1463
        %v1472 = vsub.f32 2.0, %v1464
        %v1473 = vsub.f32 2.0, %v1465
        %v1474 = vsub.f32 2.0, %v1466
        %v1475 = vsub.f32 2.0, %v1467
        %v1476 = vsub.f32 2.0, %v1468
        %v1477 = vmul.f32 %v1453, %v1469
        %v1478 = vmul.f32 %v1454, %v1470
        %v1479 = vmul.f32 %v1455, %v1471
        %v1480 = vmul.f32 %v1456, %v1472
        %v1481 = vmul.f32 %v1457, %v1473
        %v1482 = vmul.f32 %v1458, %v1474
        %v1483 = vmul.f32 %v1459, %v1475
        %v1484 = vmul.f32 %v1460, %v1476
        %v1485 = vmul.f32 %v1437, %v1477
        %v1486 = vmul.f32 %v1438, %v1478
        %v1487 = vmul.f32 %v1439, %v1479
        %v1488 = vmul.f32 %v1440, %v1480
        %v1489 = vmul.f32 %v1441, %v1481
        %v1490 = vmul.f32 %v1442, %v1482
        %v1491 = vmul.f32 %v1443, %v1483
        %v1492 = vmul.f32 %v1444, %v1484
        %v1493 = vmul.f32 %v1241, %v1485
        %v1494 = vmul.f32 %v1243, %v1486
        %v1495 = vmul.f32 %v1395, %v1487
        %v1496 = vmul.f32 %v1397, %v1488
        %v1497 = vmul.f32 %v1247, %v1489
        %v1498 = vmul.f32 %v1249, %v1490
        %v1499 = vmul.f32 %v1401, %v1491
        %v1500 = vmul.f32 %v1403, %v1492
        %1501 = vmatprep.subr.mxu0 0.0
        %1502 = vmatpush1.msra.mxu0 %v728
        %1503 = vmatprep.subr.mxu0 0.0
        %1504 = vmatpush1.msra.mxu0 %v729
        %1505 = vmatprep.subr.mxu0 0.0
        %1506 = vmatpush1.msra.mxu0 %v730
        %1507 = vmatprep.subr.mxu0 0.0
        %1508 = vmatpush1.msra.mxu0 %v731
        %1509 = vmatprep.subr.mxu0 0.0
        %1510 = vmatpush1.msra.mxu0 %v732
        %1511 = vmatprep.subr.mxu0 0.0
        %1512 = vmatpush1.msra.mxu0 %v733
        %1513 = vmatprep.subr.mxu0 0.0
        %1514 = vmatpush1.msra.mxu0 %v734
        %1515 = vmatprep.subr.mxu0 0.0
        %1516 = vmatpush1.msra.mxu0 %v735
        %1517 = vmatprep.subr.mxu0 0.0
        %1518 = vmatpush1.msra.mxu0 %v736
        %1519 = vmatprep.subr.mxu0 0.0
        %1520 = vmatpush1.msra.mxu0 %v737
        %1521 = vmatprep.subr.mxu0 0.0
        %1522 = vmatpush1.msra.mxu0 %v738
        %1523 = vmatprep.subr.mxu0 0.0
        %1524 = vmatpush1.msra.mxu0 %v739
        %1525 = vmatprep.subr.mxu0 0.0
        %1526 = vmatpush1.msra.mxu0 %v740
        %1527 = vmatprep.subr.mxu0 0.0
        %1528 = vmatpush1.msra.mxu0 %v741
        %1529 = vmatprep.subr.mxu0 0.0
        %1530 = vmatpush1.msra.mxu0 %v742
        %1531 = vmatprep.subr.mxu0 0.0
        %1532 = vmatpush1.msra.mxu0 %v743
        %1533 = vmatprep.subr.mxu0 0.0
        %1534 = vmatpush1.msra.mxu0 %v744
        %1535 = vmatprep.subr.mxu0 0.0
        %1536 = vmatpush1.msra.mxu0 %v745
        %1537 = vmatprep.subr.mxu0 0.0
        %1538 = vmatpush1.msra.mxu0 %v746
        %1539 = vmatprep.subr.mxu0 0.0
        %1540 = vmatpush1.msra.mxu0 %v747
        %1541 = vmatprep.subr.mxu0 0.0
        %1542 = vmatpush1.msra.mxu0 %v748
        %1543 = vmatprep.subr.mxu0 0.0
        %1544 = vmatpush1.msra.mxu0 %v749
        %1545 = vmatprep.subr.mxu0 0.0
        %1546 = vmatpush1.msra.mxu0 %v750
        %1547 = vmatprep.subr.mxu0 0.0
        %1548 = vmatpush1.msra.mxu0 %v751
        %1549 = vmatprep.subr.mxu0 0.0
        %1550 = vmatpush1.msra.mxu0 %v752
        %1551 = vmatprep.subr.mxu0 0.0
        %1552 = vmatpush1.msra.mxu0 %v753
        %1553 = vmatprep.subr.mxu0 0.0
        %1554 = vmatpush1.msra.mxu0 %v754
        %1555 = vmatprep.subr.mxu0 0.0
        %1556 = vmatpush1.msra.mxu0 %v755
        %1557 = vmatprep.subr.mxu0 0.0
        %1558 = vmatpush1.msra.mxu0 %v756
        %1559 = vmatprep.subr.mxu0 0.0
        %1560 = vmatpush1.msra.mxu0 %v757
        %1561 = vmatprep.subr.mxu0 0.0
        %1562 = vmatpush1.msra.mxu0 %v758
        %1563 = vmatprep.subr.mxu0 0.0
        %1564 = vmatpush1.msra.mxu0 %v759
        %1565 = vmatprep.mubr.f32.mxu0 %v1494
        %1566 = vmatmul.mubr.f32.gmra.mrb[0].mxu0 %v1493
        %v1567 = vpop.f32.mrb[0].mxu0
        %v1568 = vadd.f32 %v841, %v1567
        %v1569 = vpop.f32.mrb[0].mxu0
        %1570 = vmatprep.mubr.f32.mxu0 %v1498
        %1571 = vmatmul.mubr.f32.gmra.mrb[0].mxu0 %v1497
        %v1572 = vpop.f32.mrb[0].mxu0
        %v1573 = vadd.f32 %v841, %v1572
        %v1574 = vpop.f32.mrb[0].mxu0
        %1575 = vdwg.mxu0
        %1576 = vmatprep.subr.mxu0 0.0
        %1577 = vmatpush1.msra.mxu0 %v760
        %1578 = vmatprep.subr.mxu0 0.0
        %1579 = vmatpush1.msra.mxu0 %v761
        %1580 = vmatprep.subr.mxu0 0.0
        %1581 = vmatpush1.msra.mxu0 %v762
        %1582 = vmatprep.subr.mxu0 0.0
        %1583 = vmatpush1.msra.mxu0 %v763
        %1584 = vmatprep.subr.mxu0 0.0
        %1585 = vmatpush1.msra.mxu0 %v764
        %1586 = vmatprep.subr.mxu0 0.0
        %1587 = vmatpush1.msra.mxu0 %v765
        %1588 = vmatprep.subr.mxu0 0.0
        %1589 = vmatpush1.msra.mxu0 %v766
        %1590 = vmatprep.subr.mxu0 0.0
        %1591 = vmatpush1.msra.mxu0 %v767
        %1592 = vmatprep.subr.mxu0 0.0
        %1593 = vmatpush1.msra.mxu0 %v768
        %1594 = vmatprep.subr.mxu0 0.0
        %1595 = vmatpush1.msra.mxu0 %v769
        %1596 = vmatprep.subr.mxu0 0.0
        %1597 = vmatpush1.msra.mxu0 %v770
        %1598 = vmatprep.subr.mxu0 0.0
        %1599 = vmatpush1.msra.mxu0 %v771
        %1600 = vmatprep.subr.mxu0 0.0
        %1601 = vmatpush1.msra.mxu0 %v772
        %1602 = vmatprep.subr.mxu0 0.0
        %1603 = vmatpush1.msra.mxu0 %v773
        %1604 = vmatprep.subr.mxu0 0.0
        %1605 = vmatpush1.msra.mxu0 %v774
        %1606 = vmatprep.subr.mxu0 0.0
        %1607 = vmatpush1.msra.mxu0 %v775
        %1608 = vmatprep.subr.mxu0 0.0
        %1609 = vmatpush1.msra.mxu0 %v776
        %1610 = vmatprep.subr.mxu0 0.0
        %1611 = vmatpush1.msra.mxu0 %v777
        %1612 = vmatprep.subr.mxu0 0.0
        %1613 = vmatpush1.msra.mxu0 %v778
        %1614 = vmatprep.subr.mxu0 0.0
        %1615 = vmatpush1.msra.mxu0 %v779
        %1616 = vmatprep.subr.mxu0 0.0
        %1617 = vmatpush1.msra.mxu0 %v780
        %1618 = vmatprep.subr.mxu0 0.0
        %1619 = vmatpush1.msra.mxu0 %v781
        %1620 = vmatprep.subr.mxu0 0.0
        %1621 = vmatpush1.msra.mxu0 %v782
        %1622 = vmatprep.subr.mxu0 0.0
        %1623 = vmatpush1.msra.mxu0 %v783
        %1624 = vmatprep.subr.mxu0 0.0
        %1625 = vmatpush1.msra.mxu0 %v784
        %1626 = vmatprep.subr.mxu0 0.0
        %1627 = vmatpush1.msra.mxu0 %v785
        %1628 = vmatprep.subr.mxu0 0.0
        %1629 = vmatpush1.msra.mxu0 %v786
        %1630 = vmatprep.subr.mxu0 0.0
        %1631 = vmatpush1.msra.mxu0 %v787
        %1632 = vmatprep.subr.mxu0 0.0
        %1633 = vmatpush1.msra.mxu0 %v788
        %1634 = vmatprep.subr.mxu0 0.0
        %1635 = vmatpush1.msra.mxu0 %v789
        %1636 = vmatprep.subr.mxu0 0.0
        %1637 = vmatpush1.msra.mxu0 %v790
        %1638 = vmatprep.subr.mxu0 0.0
        %1639 = vmatpush1.msra.mxu0 %v791
        %1640 = vmatprep.mubr.f32.mxu0 %v1496
        %1641 = vmatmul.mubr.f32.gmra.mrb[0].mxu0 %v1495
        %v1642 = vpop.f32.mrb[0].mxu0
        %v1643 = vadd.f32 %v1568, %v1642
        %v1644 = vpop.f32.mrb[0].mxu0
        %1645 = vmatprep.mubr.f32.mxu0 %v1500
        %1646 = vmatmul.mubr.f32.gmra.mrb[0].mxu0 %v1499
        %v1647 = vpop.f32.mrb[0].mxu0
        %v1648 = vadd.f32 %v1573, %v1647
        %v1649 = vpop.f32.mrb[0].mxu0
        %1650 = vdwg.mxu0
        %v1651 = vmax.f32 %v1643, 0.0
        %v1652 = vmax.f32 %v1648, 0.0
        %v1653 = vand.u32 2147483647, %v1643
        %v1654 = vand.u32 2147483647, %v1648
        %v1655 = vsub.f32 0.0, %v1653
        %v1656 = vsub.f32 0.0, %v1654
        %v1657 = vmul.f32 %v1655, 1.442695
        %v1658 = vpow.pop %v1657
        %v1659 = vmul.f32 %v1656, 1.442695
        %v1660 = vpow.pop %v1659
        %v1661 = vadd.f32 %v1658, 1.0
        %v1662 = vlog2.pop %v1661
        %v1663 = vmul.f32 %v1662, 0.6931472
        %v1664 = vmul.f32 -0.5, %v1658
        %v1665 = vadd.f32 %v1664, 1.0
        %v1666 = vmul.f32 %v1665, %v1658
        %v1667 = vand.u32 2147483647, %v1658
        %vm1668 = vcmp.lt.f32.partialorder %v1667, 0.0004427343
        %v1669 = vsel %vm1668, %v1666, %v1663
        %v1670 = vadd.f32 %v1660, 1.0
        %v1671 = vlog2.pop %v1670
        %v1672 = vmul.f32 %v1671, 0.6931472
        %v1673 = vmul.f32 -0.5, %v1660
        %v1674 = vadd.f32 %v1673, 1.0
        %v1675 = vmul.f32 %v1674, %v1660
        %v1676 = vand.u32 2147483647, %v1660
        %vm1677 = vcmp.lt.f32.partialorder %v1676, 0.0004427343
        %v1678 = vsel %vm1677, %v1675, %v1672
        %v1679 = vadd.f32 %v1651, %v1669
        %v1680 = vadd.f32 %v1652, %v1678
        %v1681 = vadd.f32 %v1679, 1e-08
        %v1682 = vadd.f32 %v1680, 1e-08
        %1683 = vst [vmem:[%s341] sm:$0xff] %v1681
        %1684 = vst [vmem:[%s341 + $0x8] sm:$0xff] %v1682
        %s1685 = sand.u32 %s186, 1
        %s1686 = scalar_lea.sflag [#allocation4], %s1685
        %s1687 = sand.u32 %s186, 1
        %s1688 = smul.addr %s1687, 16
        %s1689 = scalar_lea.vmem [#allocation10], %s1688
        // Predicated region
        $region65: #{tpu_custom_call.1} parent=47 // pred_check
          %p1690 = pneg %p196
        $region66: #{tpu_custom_call.1} parent=47 // pred_check_branch
          %1692 = sbr.rel (%p1690) target = $region68
        $region67: #{tpu_custom_call.1} parent=47 // pred_region
          %s1693 = smul.u32 2, %s26
          %s1695 = ssub.s32 256, 256
          %1696 = vsyncadd %s1686, %s1695
          %s1697 = smul.addr %s1693, 128
          %s1698 = scalar_lea.hbm %s7, %s1697
          %s1699 = sshll.u32 %s1689, 4
          %s1700 = int_to_ptr.vmem [resolvable:$true] %s1699
          %1705 = dma.vmem_to_hbm [thread:$0]  %s1700, 256, %s1698, %s1686, 128, 128, 8
        $region68: #{tpu_custom_call.1} parent=47 // pred_fallthru
          _
      $region48: #{tpu_custom_call.1} parent=5 // pred_fallthru
        _
      %p1706 = scmp.le.s32.totalorder 2, %s21
      // Predicated region
      $region69: #{tpu_custom_call.1} parent=5 // pred_check
        %p1707 = pneg %p1706
      $region70: #{tpu_custom_call.1} parent=5 // pred_check_branch
        %1709 = sbr.rel (%p1707) target = $region72
      $region71: #{tpu_custom_call.1} parent=5 // pred_region
        %s1710 = ssub.s32 %s21, 2
        // Predicated region
        $region73: #{tpu_custom_call.1} parent=71 // pred_check
          %p1711 = pneg %p202
        $region74: #{tpu_custom_call.1} parent=71 // pred_check_branch
          %1713 = sbr.rel (%p1711) target = $region76
        $region75: #{tpu_custom_call.1} parent=71 // pred_region
          %s1714 = sand.u32 %s187, 1
          %s1715 = scalar_lea.sflag [#allocation4], %s1714
          %s1716 = sand.u32 %s187, 1
          %s1717 = smul.addr %s1716, 16
          %s1718 = scalar_lea.vmem [#allocation10], %s1717
          %1719 = dma.done %s1715, 256
        $region76: #{tpu_custom_call.1} parent=71 // pred_fallthru
          _
      $region72: #{tpu_custom_call.1} parent=5 // pred_fallthru
        _
    $region6: #{tpu_custom_call.1} parent=1 // loop_footer
      %s25 = sadd.s32 1, %s21
    $region7: #{tpu_custom_call.1} parent=1 // loop_footer_branch
      %20 = sbr.rel target = $region3
    $region8: #{tpu_custom_call.1} parent=1 // loop_exit
      _
    %1720 = vsyncpa [#allocation3], 1
    %s1721 = scalar_lea.sflag [#allocation3], 1
    %1722 = vsyncpa %s1721, 1
    %1723 = vsyncpa [#allocation6], 1
    %1724 = vsyncpa [#allocation9], 1
    %1725 = vsyncpa [#allocation4], 1
    %s1726 = scalar_lea.sflag [#allocation4], 1
    %1727 = vsyncpa %s1726, 1

</llo_original>
